<compile_context>
chip_gen: v7x
topology: tpu7x:2x2x1
jax: 0.10.0
libtpu: 0.0.40
codegen_flags: <defaults>
</compile_context>

<pallas_src>
import math
import functools

import jax
import jax.numpy as jnp
from jax.experimental import pallas as pl
from jax.experimental.pallas import tpu as pltpu


def _layernorm(x, w, b, eps):
    # TF-style layernorm (matches BertLayerNorm): eps inside sqrt, biased var.
    u = jnp.mean(x, axis=-1, keepdims=True)
    s = jnp.mean((x - u) ** 2, axis=-1, keepdims=True)
    xn = (x - u) * jax.lax.rsqrt(s + eps)      # rsqrt -> EUP slot
    return w * xn + b


def video_embed_kernel(
    x_ref, pe_ref,
    ln_v_w_ref, ln_v_b_ref,      # LayerNorm over video_feature_size
    w_ref, b_ref,                # Linear(Dv -> D)
    ln_h_w_ref, ln_h_b_ref,      # LayerNorm over hidden_size
    out_ref,
    *, eps,
):
    x = x_ref[0]                                   # (tL, Dv) f32

    # BertLayerNorm(video_feature_size); Dropout is identity at inference.
    xn = _layernorm(x, ln_v_w_ref[...], ln_v_b_ref[...], eps)

    # Linear(Dv -> D): operands in the weight dtype (bf16), f32 accumulation.
    h = jnp.dot(xn.astype(w_ref.dtype), w_ref[...],
                preferred_element_type=jnp.float32) + b_ref[...]

    # ReLU
    h = jnp.maximum(h, 0.0)

    # BertLayerNorm(hidden_size)
    h = _layernorm(h, ln_h_w_ref[...], ln_h_b_ref[...], eps)

    # Additive sinusoidal position encoding.
    out_ref[0] = (h + pe_ref[...]).astype(out_ref.dtype)


def _sinusoidal_pe(seq_len, d_model):
    # Matches PositionEncoding: pe[:, 0::2]=sin, pe[:, 1::2]=cos (d_model even).
    position = jnp.arange(seq_len, dtype=jnp.float32)[:, None]
    div_term = jnp.exp(
        jnp.arange(0, d_model, 2, dtype=jnp.float32) * (-math.log(10000.0) / d_model)
    )
    args = position * div_term
    pe = jnp.zeros((seq_len, d_model), jnp.float32)
    pe = pe.at[:, 0::2].set(jnp.sin(args))
    pe = pe.at[:, 1::2].set(jnp.cos(args))
    return pe


def _pick_seq_tile(length):
    # Full sequence if small; otherwise a multiple-of-8 divisor near 128-256.
    if length <= 256:
        return length
    for t in (256, 128, 512, 64, 32, 16, 8):
        if length % t == 0:
            return t
    return length


def bert_embeddings_video_untied(video_features, params, *, eps=1e-12,
                                 matmul_dtype=jnp.bfloat16):
    N, L, Dv = video_features.shape
    D = params["w"].shape[1]

    pe = _sinusoidal_pe(L, D)                      # (L, D) f32, built once
    w_in = params["w"].astype(matmul_dtype)        # feed Linear weight as bf16

    tl = _pick_seq_tile(L)
    grid = (N, L // tl)

    # VMEM scoped limit: defaults (16/32 MiB) are too small for resident weights
    # at realistic D; cap well under the physical budget (64 MiB on v7x).
    try:
        vmem_limit = min(100 * 1024 * 1024,
                         int(0.8 * pltpu.get_tpu_info().vmem_capacity_bytes))
    except Exception:
        vmem_limit = 64 * 1024 * 1024

    flops = int(2 * N * L * Dv * D + 12 * N * L * (Dv + D))
    bytes_accessed = int(
        video_features.size * video_features.dtype.itemsize   # input
        + N * L * D * 4                                        # output
        + pe.size * 4                                          # PE table
        + w_in.size * w_in.dtype.itemsize                      # Linear weight
        + (2 * Dv + 3 * D) * 4                                 # LN params + bias
    )
    cost = pl.CostEstimate(flops=flops,
                           transcendentals=int(2 * N * L),
                           bytes_accessed=bytes_accessed)

    kernel = functools.partial(video_embed_kernel, eps=eps)

    def make_call(single_buffer_weights):
        if single_buffer_weights:
            # Grid-invariant weights: nothing to pipeline -> single buffer.
            def const_spec(shape):
                return pl.BlockSpec(shape, lambda b, s: (0,) * len(shape),
                                    pipeline_mode=pl.Buffered(1))
        else:
            def const_spec(shape):
                return pl.BlockSpec(shape, lambda b, s: (0,) * len(shape))

        in_specs = [
            pl.BlockSpec((1, tl, Dv), lambda b, s: (b, s, 0)),   # video features
            pl.BlockSpec((tl, D), lambda b, s: (s, 0)),          # position enc.
            const_spec((1, Dv)), const_spec((1, Dv)),            # LN(video) w, b
            const_spec((Dv, D)), const_spec((1, D)),             # Linear w, b
            const_spec((1, D)), const_spec((1, D)),              # LN(hidden) w, b
        ]

        return pl.pallas_call(
            kernel,
            out_shape=jax.ShapeDtypeStruct((N, L, D), video_features.dtype),
            grid=grid,
            in_specs=in_specs,
            out_specs=pl.BlockSpec((1, tl, D), lambda b, s: (b, s, 0)),
            compiler_params=pltpu.CompilerParams(
                dimension_semantics=("parallel", "parallel"),
                vmem_limit_bytes=vmem_limit,
            ),
            cost_estimate=cost,
        )

    args = (
        video_features, pe,
        params["ln_v_w"], params["ln_v_b"],
        w_in, params["b"],
        params["ln_h_w"], params["ln_h_b"],
    )

    try:
        return make_call(single_buffer_weights=True)(*args)
    except Exception:
        # Fallback if pl.Buffered(1) single-buffering is rejected by this
        # jax/Mosaic version: default (double-buffered) weight blocks.
        return make_call(single_buffer_weights=False)(*args)


def init_params(key, video_feature_size, hidden_size):
    Dv, D = video_feature_size, hidden_size
    scale = 0.02
    return {
        "ln_v_w": jnp.ones((1, Dv), jnp.float32),
        "ln_v_b": jnp.zeros((1, Dv), jnp.float32),
        # nn.Linear weight stored transposed to (in, out) so the kernel does x @ w
        "w": scale * jax.random.normal(key, (Dv, D), jnp.float32),
        "b": jnp.zeros((1, D), jnp.float32),
        "ln_h_w": jnp.ones((1, D), jnp.float32),
        "ln_h_b": jnp.zeros((1, D), jnp.float32),
    }


if __name__ == "__main__":
    # small config: batch=2, video seq len=8, video_feature_size=32, hidden=32
    N, Lv, Dv, D = 2, 8, 32, 32

    key = jax.random.PRNGKey(0)
    k_x, k_p = jax.random.split(key)

    video_features = jax.random.normal(k_x, (N, Lv, Dv), jnp.float32)
    params = init_params(k_p, Dv, D)

    # TODO(synk): nn.Dropout is treated as identity (inference semantics); no
    # RNG-based dropout mask is applied in the kernel.
    out = bert_embeddings_video_untied(video_features, params)
    out = jax.block_until_ready(out)

    assert out.shape == (N, Lv, D)
    assert bool(jnp.all(jnp.isfinite(out)))
    print("KERNEL_OK")
</pallas_src>

<mosaic_0001>
module attributes {stable_mosaic.version = 11 : i64} {
  func.func @video_embed_kernel(%arg0: i32, %arg1: i32, %arg2: memref<1x8x32xf32, #tpu.memory_space<vmem>>, %arg3: memref<8x32xf32, #tpu.memory_space<vmem>>, %arg4: memref<1x32xf32, #tpu.memory_space<vmem>>, %arg5: memref<1x32xf32, #tpu.memory_space<vmem>>, %arg6: memref<32x32xbf16, #tpu.memory_space<vmem>>, %arg7: memref<1x32xf32, #tpu.memory_space<vmem>>, %arg8: memref<1x32xf32, #tpu.memory_space<vmem>>, %arg9: memref<1x32xf32, #tpu.memory_space<vmem>>, %arg10: memref<1x8x32xf32, #tpu.memory_space<vmem>>) attributes {dimension_semantics = [#tpu.dimension_semantics<parallel>, #tpu.dimension_semantics<parallel>], iteration_bounds = array<i64: 2, 1>, scalar_prefetch = 0 : i64, scratch_operands = 0 : i64, tpu.core_type = #tpu.core_type<tc>, window_params = [{transform_indices = @transform_0, window_bounds = array<i64: 1, 8, 32>}, {transform_indices = @transform_1, window_bounds = array<i64: 8, 32>}, {pipeline_mode = #tpu.pipeline_mode<synchronous>, transform_indices = @transform_2, window_bounds = array<i64: 1, 32>}, {pipeline_mode = #tpu.pipeline_mode<synchronous>, transform_indices = @transform_3, window_bounds = array<i64: 1, 32>}, {pipeline_mode = #tpu.pipeline_mode<synchronous>, transform_indices = @transform_4, window_bounds = array<i64: 32, 32>}, {pipeline_mode = #tpu.pipeline_mode<synchronous>, transform_indices = @transform_5, window_bounds = array<i64: 1, 32>}, {pipeline_mode = #tpu.pipeline_mode<synchronous>, transform_indices = @transform_6, window_bounds = array<i64: 1, 32>}, {pipeline_mode = #tpu.pipeline_mode<synchronous>, transform_indices = @transform_7, window_bounds = array<i64: 1, 32>}, {transform_indices = @transform_8, window_bounds = array<i64: 1, 8, 32>}]} {
    %c0 = arith.constant 0 : index
    %c0_0 = arith.constant 0 : index
    %c0_1 = arith.constant 0 : index
    %0 = vector.load %arg2[%c0, %c0_0, %c0_1] : memref<1x8x32xf32, #tpu.memory_space<vmem>>, vector<1x8x32xf32>
    %1 = vector.shape_cast %0 : vector<1x8x32xf32> to vector<8x32xf32>
    %c0_2 = arith.constant 0 : index
    %c0_3 = arith.constant 0 : index
    %2 = vector.load %arg4[%c0_2, %c0_3] : memref<1x32xf32, #tpu.memory_space<vmem>>, vector<1x32xf32>
    %c0_4 = arith.constant 0 : index
    %c0_5 = arith.constant 0 : index
    %3 = vector.load %arg5[%c0_4, %c0_5] : memref<1x32xf32, #tpu.memory_space<vmem>>, vector<1x32xf32>
    %cst = arith.constant dense<0.000000e+00> : vector<8xf32>
    %4 = vector.multi_reduction <add>, %1, %cst [1] : vector<8x32xf32> to vector<8xf32>
    %5 = vector.shape_cast %4 : vector<8xf32> to vector<8x1xf32>
    %cst_6 = arith.constant 3.200000e+01 : f32
    %6 = vector.broadcast %cst_6 : f32 to vector<8x1xf32>
    %7 = arith.divf %5, %6 : vector<8x1xf32>
    %8 = vector.broadcast %7 : vector<8x1xf32> to vector<8x32xf32>
    %9 = arith.subf %1, %8 : vector<8x32xf32>
    %10 = arith.mulf %9, %9 : vector<8x32xf32>
    %cst_7 = arith.constant dense<0.000000e+00> : vector<8xf32>
    %11 = vector.multi_reduction <add>, %10, %cst_7 [1] : vector<8x32xf32> to vector<8xf32>
    %12 = vector.shape_cast %11 : vector<8xf32> to vector<8x1xf32>
    %cst_8 = arith.constant 3.200000e+01 : f32
    %13 = vector.broadcast %cst_8 : f32 to vector<8x1xf32>
    %14 = arith.divf %12, %13 : vector<8x1xf32>
    %15 = vector.broadcast %7 : vector<8x1xf32> to vector<8x32xf32>
    %16 = arith.subf %1, %15 : vector<8x32xf32>
    %cst_9 = arith.constant 9.99999996E-13 : f32
    %17 = vector.broadcast %cst_9 : f32 to vector<8x1xf32>
    %18 = arith.addf %14, %17 : vector<8x1xf32>
    %19 = math.rsqrt %18 : vector<8x1xf32>
    %20 = vector.broadcast %19 : vector<8x1xf32> to vector<8x32xf32>
    %21 = arith.mulf %16, %20 : vector<8x32xf32>
    %22 = vector.broadcast %2 : vector<1x32xf32> to vector<8x32xf32>
    %23 = arith.mulf %22, %21 : vector<8x32xf32>
    %24 = vector.broadcast %3 : vector<1x32xf32> to vector<8x32xf32>
    %25 = arith.addf %23, %24 : vector<8x32xf32>
    %26 = arith.truncf %25 : vector<8x32xf32> to vector<8x32xbf16>
    %c0_10 = arith.constant 0 : index
    %c0_11 = arith.constant 0 : index
    %27 = vector.load %arg6[%c0_10, %c0_11] : memref<32x32xbf16, #tpu.memory_space<vmem>>, vector<32x32xbf16>
    %cst_12 = arith.constant dense<0.000000e+00> : vector<8x32xf32>
    %28 = tpu.matmul %26, %27, %cst_12 {dimension_numbers = #tpu.dot_dimension_numbers<[1], [0], [0], [1], [0, 0, 1, 1], [], []>} : vector<8x32xbf16>, vector<32x32xbf16>, vector<8x32xf32> -> vector<8x32xf32>
    %c0_13 = arith.constant 0 : index
    %c0_14 = arith.constant 0 : index
    %29 = vector.load %arg7[%c0_13, %c0_14] : memref<1x32xf32, #tpu.memory_space<vmem>>, vector<1x32xf32>
    %30 = vector.broadcast %29 : vector<1x32xf32> to vector<8x32xf32>
    %31 = arith.addf %28, %30 : vector<8x32xf32>
    %cst_15 = arith.constant 0.000000e+00 : f32
    %32 = vector.broadcast %cst_15 : f32 to vector<8x32xf32>
    %33 = arith.maximumf %31, %32 : vector<8x32xf32>
    %c0_16 = arith.constant 0 : index
    %c0_17 = arith.constant 0 : index
    %34 = vector.load %arg8[%c0_16, %c0_17] : memref<1x32xf32, #tpu.memory_space<vmem>>, vector<1x32xf32>
    %c0_18 = arith.constant 0 : index
    %c0_19 = arith.constant 0 : index
    %35 = vector.load %arg9[%c0_18, %c0_19] : memref<1x32xf32, #tpu.memory_space<vmem>>, vector<1x32xf32>
    %cst_20 = arith.constant dense<0.000000e+00> : vector<8xf32>
    %36 = vector.multi_reduction <add>, %33, %cst_20 [1] : vector<8x32xf32> to vector<8xf32>
    %37 = vector.shape_cast %36 : vector<8xf32> to vector<8x1xf32>
    %cst_21 = arith.constant 3.200000e+01 : f32
    %38 = vector.broadcast %cst_21 : f32 to vector<8x1xf32>
    %39 = arith.divf %37, %38 : vector<8x1xf32>
    %40 = vector.broadcast %39 : vector<8x1xf32> to vector<8x32xf32>
    %41 = arith.subf %33, %40 : vector<8x32xf32>
    %42 = arith.mulf %41, %41 : vector<8x32xf32>
    %cst_22 = arith.constant dense<0.000000e+00> : vector<8xf32>
    %43 = vector.multi_reduction <add>, %42, %cst_22 [1] : vector<8x32xf32> to vector<8xf32>
    %44 = vector.shape_cast %43 : vector<8xf32> to vector<8x1xf32>
    %cst_23 = arith.constant 3.200000e+01 : f32
    %45 = vector.broadcast %cst_23 : f32 to vector<8x1xf32>
    %46 = arith.divf %44, %45 : vector<8x1xf32>
    %47 = vector.broadcast %39 : vector<8x1xf32> to vector<8x32xf32>
    %48 = arith.subf %33, %47 : vector<8x32xf32>
    %cst_24 = arith.constant 9.99999996E-13 : f32
    %49 = vector.broadcast %cst_24 : f32 to vector<8x1xf32>
    %50 = arith.addf %46, %49 : vector<8x1xf32>
    %51 = math.rsqrt %50 : vector<8x1xf32>
    %52 = vector.broadcast %51 : vector<8x1xf32> to vector<8x32xf32>
    %53 = arith.mulf %48, %52 : vector<8x32xf32>
    %54 = vector.broadcast %34 : vector<1x32xf32> to vector<8x32xf32>
    %55 = arith.mulf %54, %53 : vector<8x32xf32>
    %56 = vector.broadcast %35 : vector<1x32xf32> to vector<8x32xf32>
    %57 = arith.addf %55, %56 : vector<8x32xf32>
    %c0_25 = arith.constant 0 : index
    %c0_26 = arith.constant 0 : index
    %58 = vector.load %arg3[%c0_25, %c0_26] : memref<8x32xf32, #tpu.memory_space<vmem>>, vector<8x32xf32>
    %59 = arith.addf %57, %58 : vector<8x32xf32>
    %c0_27 = arith.constant 0 : index
    %c0_28 = arith.constant 0 : index
    %c0_29 = arith.constant 0 : index
    %60 = vector.load %arg10[%c0_27, %c0_28, %c0_29] : memref<1x8x32xf32, #tpu.memory_space<vmem>>, vector<1x8x32xf32>
    %61 = vector.shape_cast %60 : vector<1x8x32xf32> to vector<8x32xf32>
    %62 = vector.shape_cast %59 : vector<8x32xf32> to vector<1x8x32xf32>
    tpu.vector_store %arg10[%c0_27, %c0_28, %c0_29], %62 {strides = array<i32>} : memref<1x8x32xf32, #tpu.memory_space<vmem>>, vector<1x8x32xf32>,
    return
  }
  func.func @transform_0(%arg0: i32, %arg1: i32) -> (i32, i32, i32) {
    %c0_i32 = arith.constant 0 : i32
    %c0_i32_0 = arith.constant 0 : i32
    return %arg0, %arg1, %c0_i32 : i32, i32, i32
  }
  func.func @transform_1(%arg0: i32, %arg1: i32) -> (i32, i32) {
    %c0_i32 = arith.constant 0 : i32
    %c0_i32_0 = arith.constant 0 : i32
    return %arg1, %c0_i32 : i32, i32
  }
  func.func @transform_2(%arg0: i32, %arg1: i32) -> (i32, i32) {
    %c0_i32 = arith.constant 0 : i32
    %c0_i32_0 = arith.constant 0 : i32
    %c0_i32_1 = arith.constant 0 : i32
    return %c0_i32, %c0_i32_0 : i32, i32
  }
  func.func @transform_3(%arg0: i32, %arg1: i32) -> (i32, i32) {
    %c0_i32 = arith.constant 0 : i32
    %c0_i32_0 = arith.constant 0 : i32
    %c0_i32_1 = arith.constant 0 : i32
    return %c0_i32, %c0_i32_0 : i32, i32
  }
  func.func @transform_4(%arg0: i32, %arg1: i32) -> (i32, i32) {
    %c0_i32 = arith.constant 0 : i32
    %c0_i32_0 = arith.constant 0 : i32
    %c0_i32_1 = arith.constant 0 : i32
    return %c0_i32, %c0_i32_0 : i32, i32
  }
  func.func @transform_5(%arg0: i32, %arg1: i32) -> (i32, i32) {
    %c0_i32 = arith.constant 0 : i32
    %c0_i32_0 = arith.constant 0 : i32
    %c0_i32_1 = arith.constant 0 : i32
    return %c0_i32, %c0_i32_0 : i32, i32
  }
  func.func @transform_6(%arg0: i32, %arg1: i32) -> (i32, i32) {
    %c0_i32 = arith.constant 0 : i32
    %c0_i32_0 = arith.constant 0 : i32
    %c0_i32_1 = arith.constant 0 : i32
    return %c0_i32, %c0_i32_0 : i32, i32
  }
  func.func @transform_7(%arg0: i32, %arg1: i32) -> (i32, i32) {
    %c0_i32 = arith.constant 0 : i32
    %c0_i32_0 = arith.constant 0 : i32
    %c0_i32_1 = arith.constant 0 : i32
    return %c0_i32, %c0_i32_0 : i32, i32
  }
  func.func @transform_8(%arg0: i32, %arg1: i32) -> (i32, i32, i32) {
    %c0_i32 = arith.constant 0 : i32
    %c0_i32_0 = arith.constant 0 : i32
    return %arg0, %arg1, %c0_i32 : i32, i32, i32
  }
}

module attributes {stable_mosaic.version = 11 : i64} {
  func.func @video_embed_kernel(%arg0: i32, %arg1: i32, %arg2: memref<1x8x32xf32, #tpu.memory_space<vmem>>, %arg3: memref<8x32xf32, #tpu.memory_space<vmem>>, %arg4: memref<1x32xf32, #tpu.memory_space<vmem>>, %arg5: memref<1x32xf32, #tpu.memory_space<vmem>>, %arg6: memref<32x32xbf16, #tpu.memory_space<vmem>>, %arg7: memref<1x32xf32, #tpu.memory_space<vmem>>, %arg8: memref<1x32xf32, #tpu.memory_space<vmem>>, %arg9: memref<1x32xf32, #tpu.memory_space<vmem>>, %arg10: memref<1x8x32xf32, #tpu.memory_space<vmem>>) attributes {dimension_semantics = [#tpu.dimension_semantics<parallel>, #tpu.dimension_semantics<parallel>], iteration_bounds = array<i64: 2, 1>, scalar_prefetch = 0 : i64, scratch_operands = 0 : i64, tpu.core_type = #tpu.core_type<tc>, window_params = [{transform_indices = @transform_0, window_bounds = array<i64: 1, 8, 32>}, {transform_indices = @transform_1, window_bounds = array<i64: 8, 32>}, {pipeline_mode = #tpu.pipeline_mode<synchronous>, transform_indices = @transform_2, window_bounds = array<i64: 1, 32>}, {pipeline_mode = #tpu.pipeline_mode<synchronous>, transform_indices = @transform_3, window_bounds = array<i64: 1, 32>}, {pipeline_mode = #tpu.pipeline_mode<synchronous>, transform_indices = @transform_4, window_bounds = array<i64: 32, 32>}, {pipeline_mode = #tpu.pipeline_mode<synchronous>, transform_indices = @transform_5, window_bounds = array<i64: 1, 32>}, {pipeline_mode = #tpu.pipeline_mode<synchronous>, transform_indices = @transform_6, window_bounds = array<i64: 1, 32>}, {pipeline_mode = #tpu.pipeline_mode<synchronous>, transform_indices = @transform_7, window_bounds = array<i64: 1, 32>}, {transform_indices = @transform_8, window_bounds = array<i64: 1, 8, 32>}]} {
    %c0 = arith.constant 0 : index
    %c0_0 = arith.constant 0 : index
    %c0_1 = arith.constant 0 : index
    %0 = vector.load %arg2[%c0, %c0_0, %c0_1] : memref<1x8x32xf32, #tpu.memory_space<vmem>>, vector<1x8x32xf32>
    %1 = vector.shape_cast %0 : vector<1x8x32xf32> to vector<8x32xf32>
    %c0_2 = arith.constant 0 : index
    %c0_3 = arith.constant 0 : index
    %2 = vector.load %arg4[%c0_2, %c0_3] : memref<1x32xf32, #tpu.memory_space<vmem>>, vector<1x32xf32>
    %c0_4 = arith.constant 0 : index
    %c0_5 = arith.constant 0 : index
    %3 = vector.load %arg5[%c0_4, %c0_5] : memref<1x32xf32, #tpu.memory_space<vmem>>, vector<1x32xf32>
    %cst = arith.constant dense<0.000000e+00> : vector<8xf32>
    %4 = vector.multi_reduction <add>, %1, %cst [1] : vector<8x32xf32> to vector<8xf32>
    %5 = vector.shape_cast %4 : vector<8xf32> to vector<8x1xf32>
    %cst_6 = arith.constant 3.200000e+01 : f32
    %6 = vector.broadcast %cst_6 : f32 to vector<8x1xf32>
    %7 = arith.divf %5, %6 : vector<8x1xf32>
    %8 = vector.broadcast %7 : vector<8x1xf32> to vector<8x32xf32>
    %9 = arith.subf %1, %8 : vector<8x32xf32>
    %10 = arith.mulf %9, %9 : vector<8x32xf32>
    %cst_7 = arith.constant dense<0.000000e+00> : vector<8xf32>
    %11 = vector.multi_reduction <add>, %10, %cst_7 [1] : vector<8x32xf32> to vector<8xf32>
    %12 = vector.shape_cast %11 : vector<8xf32> to vector<8x1xf32>
    %cst_8 = arith.constant 3.200000e+01 : f32
    %13 = vector.broadcast %cst_8 : f32 to vector<8x1xf32>
    %14 = arith.divf %12, %13 : vector<8x1xf32>
    %15 = vector.broadcast %7 : vector<8x1xf32> to vector<8x32xf32>
    %16 = arith.subf %1, %15 : vector<8x32xf32>
    %cst_9 = arith.constant 9.99999996E-13 : f32
    %17 = vector.broadcast %cst_9 : f32 to vector<8x1xf32>
    %18 = arith.addf %14, %17 : vector<8x1xf32>
    %19 = math.rsqrt %18 : vector<8x1xf32>
    %20 = vector.broadcast %19 : vector<8x1xf32> to vector<8x32xf32>
    %21 = arith.mulf %16, %20 : vector<8x32xf32>
    %22 = vector.broadcast %2 : vector<1x32xf32> to vector<8x32xf32>
    %23 = arith.mulf %22, %21 : vector<8x32xf32>
    %24 = vector.broadcast %3 : vector<1x32xf32> to vector<8x32xf32>
    %25 = arith.addf %23, %24 : vector<8x32xf32>
    %26 = arith.truncf %25 : vector<8x32xf32> to vector<8x32xbf16>
    %c0_10 = arith.constant 0 : index
    %c0_11 = arith.constant 0 : index
    %27 = vector.load %arg6[%c0_10, %c0_11] : memref<32x32xbf16, #tpu.memory_space<vmem>>, vector<32x32xbf16>
    %cst_12 = arith.constant dense<0.000000e+00> : vector<8x32xf32>
    %28 = tpu.matmul %26, %27, %cst_12 {dimension_numbers = #tpu.dot_dimension_numbers<[1], [0], [0], [1], [0, 0, 1, 1], [], []>} : vector<8x32xbf16>, vector<32x32xbf16>, vector<8x32xf32> -> vector<8x32xf32>
    %c0_13 = arith.constant 0 : index
    %c0_14 = arith.constant 0 : index
    %29 = vector.load %arg7[%c0_13, %c0_14] : memref<1x32xf32, #tpu.memory_space<vmem>>, vector<1x32xf32>
    %30 = vector.broadcast %29 : vector<1x32xf32> to vector<8x32xf32>
    %31 = arith.addf %28, %30 : vector<8x32xf32>
    %cst_15 = arith.constant 0.000000e+00 : f32
    %32 = vector.broadcast %cst_15 : f32 to vector<8x32xf32>
    %33 = arith.maximumf %31, %32 : vector<8x32xf32>
    %c0_16 = arith.constant 0 : index
    %c0_17 = arith.constant 0 : index
    %34 = vector.load %arg8[%c0_16, %c0_17] : memref<1x32xf32, #tpu.memory_space<vmem>>, vector<1x32xf32>
    %c0_18 = arith.constant 0 : index
    %c0_19 = arith.constant 0 : index
    %35 = vector.load %arg9[%c0_18, %c0_19] : memref<1x32xf32, #tpu.memory_space<vmem>>, vector<1x32xf32>
    %cst_20 = arith.constant dense<0.000000e+00> : vector<8xf32>
    %36 = vector.multi_reduction <add>, %33, %cst_20 [1] : vector<8x32xf32> to vector<8xf32>
    %37 = vector.shape_cast %36 : vector<8xf32> to vector<8x1xf32>
    %cst_21 = arith.constant 3.200000e+01 : f32
    %38 = vector.broadcast %cst_21 : f32 to vector<8x1xf32>
    %39 = arith.divf %37, %38 : vector<8x1xf32>
    %40 = vector.broadcast %39 : vector<8x1xf32> to vector<8x32xf32>
    %41 = arith.subf %33, %40 : vector<8x32xf32>
    %42 = arith.mulf %41, %41 : vector<8x32xf32>
    %cst_22 = arith.constant dense<0.000000e+00> : vector<8xf32>
    %43 = vector.multi_reduction <add>, %42, %cst_22 [1] : vector<8x32xf32> to vector<8xf32>
    %44 = vector.shape_cast %43 : vector<8xf32> to vector<8x1xf32>
    %cst_23 = arith.constant 3.200000e+01 : f32
    %45 = vector.broadcast %cst_23 : f32 to vector<8x1xf32>
    %46 = arith.divf %44, %45 : vector<8x1xf32>
    %47 = vector.broadcast %39 : vector<8x1xf32> to vector<8x32xf32>
    %48 = arith.subf %33, %47 : vector<8x32xf32>
    %cst_24 = arith.constant 9.99999996E-13 : f32
    %49 = vector.broadcast %cst_24 : f32 to vector<8x1xf32>
    %50 = arith.addf %46, %49 : vector<8x1xf32>
    %51 = math.rsqrt %50 : vector<8x1xf32>
    %52 = vector.broadcast %51 : vector<8x1xf32> to vector<8x32xf32>
    %53 = arith.mulf %48, %52 : vector<8x32xf32>
    %54 = vector.broadcast %34 : vector<1x32xf32> to vector<8x32xf32>
    %55 = arith.mulf %54, %53 : vector<8x32xf32>
    %56 = vector.broadcast %35 : vector<1x32xf32> to vector<8x32xf32>
    %57 = arith.addf %55, %56 : vector<8x32xf32>
    %c0_25 = arith.constant 0 : index
    %c0_26 = arith.constant 0 : index
    %58 = vector.load %arg3[%c0_25, %c0_26] : memref<8x32xf32, #tpu.memory_space<vmem>>, vector<8x32xf32>
    %59 = arith.addf %57, %58 : vector<8x32xf32>
    %c0_27 = arith.constant 0 : index
    %c0_28 = arith.constant 0 : index
    %c0_29 = arith.constant 0 : index
    %60 = vector.load %arg10[%c0_27, %c0_28, %c0_29] : memref<1x8x32xf32, #tpu.memory_space<vmem>>, vector<1x8x32xf32>
    %61 = vector.shape_cast %60 : vector<1x8x32xf32> to vector<8x32xf32>
    %62 = vector.shape_cast %59 : vector<8x32xf32> to vector<1x8x32xf32>
    tpu.vector_store %arg10[%c0_27, %c0_28, %c0_29], %62 {strides = array<i32>} : memref<1x8x32xf32, #tpu.memory_space<vmem>>, vector<1x8x32xf32>,
    return
  }
  func.func @transform_0(%arg0: i32, %arg1: i32) -> (i32, i32, i32) {
    %c0_i32 = arith.constant 0 : i32
    %c0_i32_0 = arith.constant 0 : i32
    return %arg0, %arg1, %c0_i32 : i32, i32, i32
  }
  func.func @transform_1(%arg0: i32, %arg1: i32) -> (i32, i32) {
    %c0_i32 = arith.constant 0 : i32
    %c0_i32_0 = arith.constant 0 : i32
    return %arg1, %c0_i32 : i32, i32
  }
  func.func @transform_2(%arg0: i32, %arg1: i32) -> (i32, i32) {
    %c0_i32 = arith.constant 0 : i32
    %c0_i32_0 = arith.constant 0 : i32
    %c0_i32_1 = arith.constant 0 : i32
    return %c0_i32, %c0_i32_0 : i32, i32
  }
  func.func @transform_3(%arg0: i32, %arg1: i32) -> (i32, i32) {
    %c0_i32 = arith.constant 0 : i32
    %c0_i32_0 = arith.constant 0 : i32
    %c0_i32_1 = arith.constant 0 : i32
    return %c0_i32, %c0_i32_0 : i32, i32
  }
  func.func @transform_4(%arg0: i32, %arg1: i32) -> (i32, i32) {
    %c0_i32 = arith.constant 0 : i32
    %c0_i32_0 = arith.constant 0 : i32
    %c0_i32_1 = arith.constant 0 : i32
    return %c0_i32, %c0_i32_0 : i32, i32
  }
  func.func @transform_5(%arg0: i32, %arg1: i32) -> (i32, i32) {
    %c0_i32 = arith.constant 0 : i32
    %c0_i32_0 = arith.constant 0 : i32
    %c0_i32_1 = arith.constant 0 : i32
    return %c0_i32, %c0_i32_0 : i32, i32
  }
  func.func @transform_6(%arg0: i32, %arg1: i32) -> (i32, i32) {
    %c0_i32 = arith.constant 0 : i32
    %c0_i32_0 = arith.constant 0 : i32
    %c0_i32_1 = arith.constant 0 : i32
    return %c0_i32, %c0_i32_0 : i32, i32
  }
  func.func @transform_7(%arg0: i32, %arg1: i32) -> (i32, i32) {
    %c0_i32 = arith.constant 0 : i32
    %c0_i32_0 = arith.constant 0 : i32
    %c0_i32_1 = arith.constant 0 : i32
    return %c0_i32, %c0_i32_0 : i32, i32
  }
  func.func @transform_8(%arg0: i32, %arg1: i32) -> (i32, i32, i32) {
    %c0_i32 = arith.constant 0 : i32
    %c0_i32_0 = arith.constant 0 : i32
    return %arg0, %arg1, %c0_i32 : i32, i32, i32
  }
}

</mosaic_0001>

<llo_original>
// kernel: tpu_custom_call.1
$region0: #{tpu_custom_call.1}
  #allocation0 [shape = 'u32[]', space=smem, size = 0x4, offset = 0x4, fixed_abs, tag = 'smem constant byte address 0x4 - core index']
  #allocation1 [shape = 'u32[144,128]{1,0:T(1,128)}', space=vmem, size = 0x12000, scoped, tag = 'internal scratch']
  %s0 = inlined_call_operand.hbm [shape: f32[2,8,32], index: 0, kind: input, shape index: {}]
  %s1 = inlined_call_operand.hbm [shape: f32[8,32], index: 1, kind: input, shape index: {}]
  %s2 = inlined_call_operand.hbm [shape: f32[1,32], index: 2, kind: input, shape index: {}]
  %s3 = inlined_call_operand.hbm [shape: f32[1,32], index: 3, kind: input, shape index: {}]
  %s4 = inlined_call_operand.hbm [shape: bf16[32,32], index: 4, kind: input, shape index: {}]
  %s5 = inlined_call_operand.hbm [shape: f32[1,32], index: 5, kind: input, shape index: {}]
  %s6 = inlined_call_operand.hbm [shape: f32[1,32], index: 6, kind: input, shape index: {}]
  %s7 = inlined_call_operand.hbm [shape: f32[1,32], index: 7, kind: input, shape index: {}]
  %s8 = inlined_call_operand.hbm [shape: f32[2,8,32], index: 8, kind: output, shape index: {}]
  %s9 = sld [smem:[#allocation0]]
  $region97: #{tpu_custom_call.1} parent=0
    _
  %s11 = ssub.s32 1, %s9
  %s12 = scalar_select 0, %s11, %s9
  $region1: #{tpu_custom_call.1} parent=0
    #allocation2 [shape = 'u8[8192]{0}', space=vmem, size = 0x2000, scoped, tag = 'input window, operand 0']
    #allocation3 [shape = 's32[2]{0}', space=sflag, size = 0x8, scoped, tag = 'scoped memory for tpu_custom_call.1']
    #allocation4 [shape = 's32[2]{0}', space=sflag, size = 0x8, scoped, tag = 'scoped memory for tpu_custom_call.1']
    #allocation5 [shape = 'u8[4096]{0}', space=vmem, size = 0x1000, scoped, tag = 'input window, operand 1, single buffered']
    #allocation6 [shape = 's32[1]{0}', space=sflag, size = 0x4, scoped, tag = 'scoped memory for tpu_custom_call.1']
    #allocation7 [shape = 'u8[512]{0}', space=vmem, size = 0x400, scoped, tag = 'input window, operand 2, single buffered']
    #allocation8 [shape = 'u8[512]{0}', space=vmem, size = 0x400, scoped, tag = 'input window, operand 3, single buffered']
    #allocation9 [shape = 's32[1]{0}', space=sflag, size = 0x4, scoped, tag = 'scoped memory for tpu_custom_call.1']
    #allocation10 [shape = 'u8[8192]{0}', space=vmem, size = 0x2000, scoped, tag = 'input window, operand 4, single buffered']
    #allocation11 [shape = 'u8[512]{0}', space=vmem, size = 0x400, scoped, tag = 'input window, operand 5, single buffered']
    #allocation12 [shape = 's32[1]{0}', space=sflag, size = 0x4, scoped, tag = 'scoped memory for tpu_custom_call.1']
    #allocation13 [shape = 'u8[512]{0}', space=vmem, size = 0x400, scoped, tag = 'input window, operand 6, single buffered']
    #allocation14 [shape = 'u8[512]{0}', space=vmem, size = 0x400, scoped, tag = 'input window, operand 7, single buffered']
    #allocation15 [shape = 's32[1]{0}', space=sflag, size = 0x4, scoped, tag = 'scoped memory for tpu_custom_call.1']
    #allocation16 [shape = 'u8[8192]{0}', space=vmem, size = 0x2000, scoped, tag = 'output window, operand 0']
    %13 = vsyncpa [#allocation3], 0
    %s14 = scalar_lea.sflag [#allocation3], 1
    %15 = vsyncpa %s14, 0
    %16 = vsyncpa [#allocation6], 0
    %17 = vsyncpa [#allocation9], 0
    %18 = vsyncpa [#allocation12], 0
    %19 = vsyncpa [#allocation15], 0
    %20 = vsyncpa [#allocation4], 0
    %s21 = scalar_lea.sflag [#allocation4], 1
    %22 = vsyncpa %s21, 0
    loop: start=0, step=1, limit=4
    $region2: #{tpu_custom_call.1} parent=1 // loop_pre_header
      _
    $region3: #{tpu_custom_call.1} parent=1 // loop_header
      %s24 = sphi 0, %s28
      %p25 = scmp.ge.s32.totalorder %s24, 4
      %s31 = sphi 0, %s43
      %s32 = sphi 0, %s39
      %s33 = sphi 0, %s31
      %s34 = sphi 0, %s32
      %s35 = sphi 0, %s33
      %s36 = sphi 0, %s34
      %s48 = sphi 0, %s50
      %s51 = sphi 0, %s48
      %s52 = sphi 0, %s51
      %s68 = sphi 0, %s52
      %s74 = sphi 0, %s76
      %s77 = sphi 0, %s74
      %s78 = sphi 0, %s77
      %s94 = sphi 0, %s78
      %s98 = sphi 0, %s98
      %s100 = sphi 0, %s98
      %s101 = sphi 0, %s100
      %s115 = sphi 0, %s101
      %s119 = sphi 0, %s119
      %s121 = sphi 0, %s119
      %s122 = sphi 0, %s121
      %s136 = sphi 0, %s122
      %s140 = sphi 0, %s140
      %s142 = sphi 0, %s140
      %s143 = sphi 0, %s142
      %s157 = sphi 0, %s143
      %s161 = sphi 0, %s161
      %s163 = sphi 0, %s161
      %s164 = sphi 0, %s163
      %s178 = sphi 0, %s164
      %s182 = sphi 0, %s182
      %s184 = sphi 0, %s182
      %s185 = sphi 0, %s184
      %s199 = sphi 0, %s185
      %s203 = sphi 0, %s203
      %s205 = sphi 0, %s203
      %s206 = sphi 0, %s205
      %s220 = sphi 0, %s206
      %s228 = sphi 0, %s230
      %s231 = sphi 0, %s228
      %s232 = sphi 0, %s231
      %s248 = sphi 0, %s232
    $region4: #{tpu_custom_call.1} parent=1 // loop_header_branch
      %27 = sbr.rel (%p25) target = $region8
    $region5: #{tpu_custom_call.1} parent=1 // loop_body
      %s29 = ssub.s32 %s24, 1
      %s30 = ssub.s32 %s24, 2
      %s37 = sadd.s32 1, %s32
      %p38 = scmp.ge.s32.totalorder %s37, 1
      %s39 = scalar_select %p38, 0, %s37
      %s40 = sadd.s32 1, %s31
      %s41 = scalar_select %p38, %s40, %s31
      %p42 = scmp.ge.s32.totalorder %s41, 2
      %s43 = scalar_select %p42, 0, %s41
      %s44 = ssub.s32 %s31, %s43
      %s45 = ssub.s32 %s32, %s39
      %s46 = sor.u32 %s44, %s45
      %p47 = scmp.eq.s32.totalorder %s46, 0
      %s49 = sadd.s32 %s48, 1
      %s50 = scalar_select %p47, %s48, %s49
      %p53 = pneg %p47
      %p54 = scmp.eq.s32.totalorder %s24, 1
      %p55 = por %p53, %p54
      %p56 = scmp.ne.s32.totalorder %s48, %s51
      %p57 = scmp.eq.s32.totalorder %s24, 0
      %p58 = por %p56, %p57
      %p59 = scmp.ne.s32.totalorder %s48, %s51
      %p60 = scmp.eq.s32.totalorder %s29, 1
      %p61 = por %p59, %p60
      %p62 = scmp.ne.s32.totalorder %s51, %s52
      %p63 = scmp.eq.s32.totalorder %s29, 0
      %p64 = por %p62, %p63
      %p65 = scmp.ne.s32.totalorder %s51, %s52
      %p66 = scmp.eq.s32.totalorder %s30, 1
      %p67 = por %p65, %p66
      %p69 = scmp.ne.s32.totalorder %s52, %s68
      %p70 = scmp.eq.s32.totalorder %s30, 0
      %p71 = por %p69, %p70
      %s72 = ssub.s32 %s32, %s39
      %p73 = scmp.eq.s32.totalorder %s72, 0
      %s75 = sadd.s32 %s74, 1
      %s76 = scalar_select %p73, %s74, %s75
      %p79 = pneg %p73
      %p80 = scmp.eq.s32.totalorder %s24, 1
      %p81 = por %p79, %p80
      %p82 = scmp.ne.s32.totalorder %s74, %s77
      %p83 = scmp.eq.s32.totalorder %s24, 0
      %p84 = por %p82, %p83
      %p85 = scmp.ne.s32.totalorder %s74, %s77
      %p86 = scmp.eq.s32.totalorder %s29, 1
      %p87 = por %p85, %p86
      %p88 = scmp.ne.s32.totalorder %s77, %s78
      %p89 = scmp.eq.s32.totalorder %s29, 0
      %p90 = por %p88, %p89
      %p91 = scmp.ne.s32.totalorder %s77, %s78
      %p92 = scmp.eq.s32.totalorder %s30, 1
      %p93 = por %p91, %p92
      %p95 = scmp.ne.s32.totalorder %s78, %s94
      %p96 = scmp.eq.s32.totalorder %s30, 0
      %p97 = por %p95, %p96
      %s99 = sadd.s32 %s98, 1
      %p102 = scmp.eq.s32.totalorder %s24, 1
      %p103 = scmp.ne.s32.totalorder %s98, %s100
      %p104 = scmp.eq.s32.totalorder %s24, 0
      %p105 = por %p103, %p104
      %p106 = scmp.ne.s32.totalorder %s98, %s100
      %p107 = scmp.eq.s32.totalorder %s29, 1
      %p108 = por %p106, %p107
      %p109 = scmp.ne.s32.totalorder %s100, %s101
      %p110 = scmp.eq.s32.totalorder %s29, 0
      %p111 = por %p109, %p110
      %p112 = scmp.ne.s32.totalorder %s100, %s101
      %p113 = scmp.eq.s32.totalorder %s30, 1
      %p114 = por %p112, %p113
      %p116 = scmp.ne.s32.totalorder %s101, %s115
      %p117 = scmp.eq.s32.totalorder %s30, 0
      %p118 = por %p116, %p117
      %s120 = sadd.s32 %s119, 1
      %p123 = scmp.eq.s32.totalorder %s24, 1
      %p124 = scmp.ne.s32.totalorder %s119, %s121
      %p125 = scmp.eq.s32.totalorder %s24, 0
      %p126 = por %p124, %p125
      %p127 = scmp.ne.s32.totalorder %s119, %s121
      %p128 = scmp.eq.s32.totalorder %s29, 1
      %p129 = por %p127, %p128
      %p130 = scmp.ne.s32.totalorder %s121, %s122
      %p131 = scmp.eq.s32.totalorder %s29, 0
      %p132 = por %p130, %p131
      %p133 = scmp.ne.s32.totalorder %s121, %s122
      %p134 = scmp.eq.s32.totalorder %s30, 1
      %p135 = por %p133, %p134
      %p137 = scmp.ne.s32.totalorder %s122, %s136
      %p138 = scmp.eq.s32.totalorder %s30, 0
      %p139 = por %p137, %p138
      %s141 = sadd.s32 %s140, 1
      %p144 = scmp.eq.s32.totalorder %s24, 1
      %p145 = scmp.ne.s32.totalorder %s140, %s142
      %p146 = scmp.eq.s32.totalorder %s24, 0
      %p147 = por %p145, %p146
      %p148 = scmp.ne.s32.totalorder %s140, %s142
      %p149 = scmp.eq.s32.totalorder %s29, 1
      %p150 = por %p148, %p149
      %p151 = scmp.ne.s32.totalorder %s142, %s143
      %p152 = scmp.eq.s32.totalorder %s29, 0
      %p153 = por %p151, %p152
      %p154 = scmp.ne.s32.totalorder %s142, %s143
      %p155 = scmp.eq.s32.totalorder %s30, 1
      %p156 = por %p154, %p155
      %p158 = scmp.ne.s32.totalorder %s143, %s157
      %p159 = scmp.eq.s32.totalorder %s30, 0
      %p160 = por %p158, %p159
      %s162 = sadd.s32 %s161, 1
      %p165 = scmp.eq.s32.totalorder %s24, 1
      %p166 = scmp.ne.s32.totalorder %s161, %s163
      %p167 = scmp.eq.s32.totalorder %s24, 0
      %p168 = por %p166, %p167
      %p169 = scmp.ne.s32.totalorder %s161, %s163
      %p170 = scmp.eq.s32.totalorder %s29, 1
      %p171 = por %p169, %p170
      %p172 = scmp.ne.s32.totalorder %s163, %s164
      %p173 = scmp.eq.s32.totalorder %s29, 0
      %p174 = por %p172, %p173
      %p175 = scmp.ne.s32.totalorder %s163, %s164
      %p176 = scmp.eq.s32.totalorder %s30, 1
      %p177 = por %p175, %p176
      %p179 = scmp.ne.s32.totalorder %s164, %s178
      %p180 = scmp.eq.s32.totalorder %s30, 0
      %p181 = por %p179, %p180
      %s183 = sadd.s32 %s182, 1
      %p186 = scmp.eq.s32.totalorder %s24, 1
      %p187 = scmp.ne.s32.totalorder %s182, %s184
      %p188 = scmp.eq.s32.totalorder %s24, 0
      %p189 = por %p187, %p188
      %p190 = scmp.ne.s32.totalorder %s182, %s184
      %p191 = scmp.eq.s32.totalorder %s29, 1
      %p192 = por %p190, %p191
      %p193 = scmp.ne.s32.totalorder %s184, %s185
      %p194 = scmp.eq.s32.totalorder %s29, 0
      %p195 = por %p193, %p194
      %p196 = scmp.ne.s32.totalorder %s184, %s185
      %p197 = scmp.eq.s32.totalorder %s30, 1
      %p198 = por %p196, %p197
      %p200 = scmp.ne.s32.totalorder %s185, %s199
      %p201 = scmp.eq.s32.totalorder %s30, 0
      %p202 = por %p200, %p201
      %s204 = sadd.s32 %s203, 1
      %p207 = scmp.eq.s32.totalorder %s24, 1
      %p208 = scmp.ne.s32.totalorder %s203, %s205
      %p209 = scmp.eq.s32.totalorder %s24, 0
      %p210 = por %p208, %p209
      %p211 = scmp.ne.s32.totalorder %s203, %s205
      %p212 = scmp.eq.s32.totalorder %s29, 1
      %p213 = por %p211, %p212
      %p214 = scmp.ne.s32.totalorder %s205, %s206
      %p215 = scmp.eq.s32.totalorder %s29, 0
      %p216 = por %p214, %p215
      %p217 = scmp.ne.s32.totalorder %s205, %s206
      %p218 = scmp.eq.s32.totalorder %s30, 1
      %p219 = por %p217, %p218
      %p221 = scmp.ne.s32.totalorder %s206, %s220
      %p222 = scmp.eq.s32.totalorder %s30, 0
      %p223 = por %p221, %p222
      %s224 = ssub.s32 %s31, %s43
      %s225 = ssub.s32 %s32, %s39
      %s226 = sor.u32 %s224, %s225
      %p227 = scmp.eq.s32.totalorder %s226, 0
      %s229 = sadd.s32 %s228, 1
      %s230 = scalar_select %p227, %s228, %s229
      %p233 = pneg %p227
      %p234 = scmp.eq.s32.totalorder %s24, 1
      %p235 = por %p233, %p234
      %p236 = scmp.ne.s32.totalorder %s228, %s231
      %p237 = scmp.eq.s32.totalorder %s24, 0
      %p238 = por %p236, %p237
      %p239 = scmp.ne.s32.totalorder %s228, %s231
      %p240 = scmp.eq.s32.totalorder %s29, 1
      %p241 = por %p239, %p240
      %p242 = scmp.ne.s32.totalorder %s231, %s232
      %p243 = scmp.eq.s32.totalorder %s29, 0
      %p244 = por %p242, %p243
      %p245 = scmp.ne.s32.totalorder %s231, %s232
      %p246 = scmp.eq.s32.totalorder %s30, 1
      %p247 = por %p245, %p246
      %p249 = scmp.ne.s32.totalorder %s232, %s248
      %p250 = scmp.eq.s32.totalorder %s30, 0
      %p251 = por %p249, %p250
      %p252 = scmp.le.s32.totalorder 1, %s24
      %p253 = scmp.lt.s32.totalorder %s24, 3
      %p254 = pnand %p252, %p253
      %p255 = pneg %p254
      // Predicated region
      $region9: #{tpu_custom_call.1} parent=5 // pred_check
        _
      $region10: #{tpu_custom_call.1} parent=5 // pred_check_branch
        %257 = sbr.rel (%p254) target = $region12
      $region11: #{tpu_custom_call.1} parent=5 // pred_region
        %s258 = ssub.s32 %s24, 1
        // Predicated region
        $region13: #{tpu_custom_call.1} parent=11 // pred_check
          %p259 = pneg %p90
        $region14: #{tpu_custom_call.1} parent=11 // pred_check_branch
          %261 = sbr.rel (%p259) target = $region16
        $region15: #{tpu_custom_call.1} parent=11 // pred_region
          %s263 = ssub.s32 128, 128
          %264 = vsyncadd [#allocation6], %s263
          %s265 = smul.addr %s34, 128
          %s266 = scalar_lea.hbm %s1, %s265
          %s268 = sshll.u32 [#allocation5], 4
          %s269 = int_to_ptr.vmem [resolvable:$true] %s268
          %271 = dma.hbm_to_vmem [thread:$0]  %s266, 128, %s269, [#allocation6]
        $region16: #{tpu_custom_call.1} parent=11 // pred_fallthru
          _
        // Predicated region
        $region17: #{tpu_custom_call.1} parent=11 // pred_check
          %p272 = pneg %p111
        $region18: #{tpu_custom_call.1} parent=11 // pred_check_branch
          %274 = sbr.rel (%p272) target = $region20
        $region19: #{tpu_custom_call.1} parent=11 // pred_region
          %s276 = ssub.s32 16, 16
          %277 = vsyncadd [#allocation6], %s276
          %s279 = sshll.u32 [#allocation7], 4
          %s280 = int_to_ptr.vmem [resolvable:$true] %s279
          %282 = dma.hbm_to_vmem [thread:$0]  %s2, 16, %s280, [#allocation6]
        $region20: #{tpu_custom_call.1} parent=11 // pred_fallthru
          _
        // Predicated region
        $region21: #{tpu_custom_call.1} parent=11 // pred_check
          %p283 = pneg %p132
        $region22: #{tpu_custom_call.1} parent=11 // pred_check_branch
          %285 = sbr.rel (%p283) target = $region24
        $region23: #{tpu_custom_call.1} parent=11 // pred_region
          %s287 = ssub.s32 16, 16
          %288 = vsyncadd [#allocation9], %s287
          %s290 = sshll.u32 [#allocation8], 4
          %s291 = int_to_ptr.vmem [resolvable:$true] %s290
          %293 = dma.hbm_to_vmem [thread:$0]  %s3, 16, %s291, [#allocation9]
        $region24: #{tpu_custom_call.1} parent=11 // pred_fallthru
          _
        // Predicated region
        $region25: #{tpu_custom_call.1} parent=11 // pred_check
          %p294 = pneg %p153
        $region26: #{tpu_custom_call.1} parent=11 // pred_check_branch
          %296 = sbr.rel (%p294) target = $region28
        $region27: #{tpu_custom_call.1} parent=11 // pred_region
          %s298 = ssub.s32 256, 256
          %299 = vsyncadd [#allocation9], %s298
          %s300 = sshll.u32 [#allocation10], 4
          %s301 = int_to_ptr.vmem [resolvable:$true] %s300
          %306 = dma.hbm_to_vmem [thread:$0]  %s4, 256, %s301, [#allocation9], 64, 64, 4
        $region28: #{tpu_custom_call.1} parent=11 // pred_fallthru
          _
        // Predicated region
        $region29: #{tpu_custom_call.1} parent=11 // pred_check
          %p307 = pneg %p174
        $region30: #{tpu_custom_call.1} parent=11 // pred_check_branch
          %309 = sbr.rel (%p307) target = $region32
        $region31: #{tpu_custom_call.1} parent=11 // pred_region
          %s311 = ssub.s32 16, 16
          %312 = vsyncadd [#allocation12], %s311
          %s314 = sshll.u32 [#allocation11], 4
          %s315 = int_to_ptr.vmem [resolvable:$true] %s314
          %317 = dma.hbm_to_vmem [thread:$0]  %s5, 16, %s315, [#allocation12]
        $region32: #{tpu_custom_call.1} parent=11 // pred_fallthru
          _
        // Predicated region
        $region33: #{tpu_custom_call.1} parent=11 // pred_check
          %p318 = pneg %p195
        $region34: #{tpu_custom_call.1} parent=11 // pred_check_branch
          %320 = sbr.rel (%p318) target = $region36
        $region35: #{tpu_custom_call.1} parent=11 // pred_region
          %s322 = ssub.s32 16, 16
          %323 = vsyncadd [#allocation12], %s322
          %s325 = sshll.u32 [#allocation13], 4
          %s326 = int_to_ptr.vmem [resolvable:$true] %s325
          %328 = dma.hbm_to_vmem [thread:$0]  %s6, 16, %s326, [#allocation12]
        $region36: #{tpu_custom_call.1} parent=11 // pred_fallthru
          _
        // Predicated region
        $region37: #{tpu_custom_call.1} parent=11 // pred_check
          %p329 = pneg %p216
        $region38: #{tpu_custom_call.1} parent=11 // pred_check_branch
          %331 = sbr.rel (%p329) target = $region40
        $region39: #{tpu_custom_call.1} parent=11 // pred_region
          %s333 = ssub.s32 16, 16
          %334 = vsyncadd [#allocation15], %s333
          %s336 = sshll.u32 [#allocation14], 4
          %s337 = int_to_ptr.vmem [resolvable:$true] %s336
          %339 = dma.hbm_to_vmem [thread:$0]  %s7, 16, %s337, [#allocation15]
        $region40: #{tpu_custom_call.1} parent=11 // pred_fallthru
          _
      $region12: #{tpu_custom_call.1} parent=5 // pred_fallthru
        _
      %p340 = scmp.lt.s32.totalorder %s24, 2
      // Predicated region
      $region41: #{tpu_custom_call.1} parent=5 // pred_check
        %p341 = pneg %p340
      $region42: #{tpu_custom_call.1} parent=5 // pred_check_branch
        %343 = sbr.rel (%p341) target = $region44
      $region43: #{tpu_custom_call.1} parent=5 // pred_region
        // Predicated region
        $region45: #{tpu_custom_call.1} parent=43 // pred_check
          %p344 = pneg %p58
        $region46: #{tpu_custom_call.1} parent=43 // pred_check_branch
          %346 = sbr.rel (%p344) target = $region48
        $region47: #{tpu_custom_call.1} parent=43 // pred_region
          %s347 = sand.u32 %s48, 1
          %s348 = scalar_lea.sflag [#allocation3], %s347
          %s349 = sand.u32 %s48, 1
          %s350 = smul.addr %s349, 8
          %s351 = scalar_lea.vmem [#allocation2], %s350
          %s353 = ssub.s32 128, 128
          %354 = vsyncadd %s348, %s353
          %s355 = sadd.s32 %s32, %s31
          %s356 = smul.addr %s355, 128
          %s357 = scalar_lea.hbm %s0, %s356
          %s359 = sshll.u32 %s351, 4
          %s360 = int_to_ptr.vmem [resolvable:$true] %s359
          %362 = dma.hbm_to_vmem [thread:$0]  %s357, 128, %s360, %s348
        $region48: #{tpu_custom_call.1} parent=43 // pred_fallthru
          _
      $region44: #{tpu_custom_call.1} parent=5 // pred_fallthru
        _
      %p363 = scmp.le.s32.totalorder 1, %s24
      %p364 = scmp.lt.s32.totalorder %s24, 3
      %p365 = pnand %p363, %p364
      %p366 = pneg %p365
      // Predicated region
      $region49: #{tpu_custom_call.1} parent=5 // pred_check
        _
      $region50: #{tpu_custom_call.1} parent=5 // pred_check_branch
        %368 = sbr.rel (%p365) target = $region52
      $region51: #{tpu_custom_call.1} parent=5 // pred_region
        %s369 = ssub.s32 %s24, 1
        %s370 = sand.u32 %s51, 1
        %s371 = scalar_lea.sflag [#allocation3], %s370
        %s372 = sand.u32 %s51, 1
        %s373 = smul.addr %s372, 8
        %s374 = scalar_lea.vmem [#allocation2], %s373
        // Predicated region
        $region53: #{tpu_custom_call.1} parent=51 // pred_check
          %p375 = pneg %p64
        $region54: #{tpu_custom_call.1} parent=51 // pred_check_branch
          %377 = sbr.rel (%p375) target = $region56
        $region55: #{tpu_custom_call.1} parent=51 // pred_region
          %378 = dma.done %s371, 128
        $region56: #{tpu_custom_call.1} parent=51 // pred_fallthru
          _
        // Predicated region
        $region57: #{tpu_custom_call.1} parent=51 // pred_check
          %p379 = pneg %p90
        $region58: #{tpu_custom_call.1} parent=51 // pred_check_branch
          %381 = sbr.rel (%p379) target = $region60
        $region59: #{tpu_custom_call.1} parent=51 // pred_region
          %382 = dma.done [#allocation6], 128
        $region60: #{tpu_custom_call.1} parent=51 // pred_fallthru
          _
        // Predicated region
        $region61: #{tpu_custom_call.1} parent=51 // pred_check
          %p383 = pneg %p111
        $region62: #{tpu_custom_call.1} parent=51 // pred_check_branch
          %385 = sbr.rel (%p383) target = $region64
        $region63: #{tpu_custom_call.1} parent=51 // pred_region
          %386 = dma.done [#allocation6], 16
        $region64: #{tpu_custom_call.1} parent=51 // pred_fallthru
          _
        // Predicated region
        $region65: #{tpu_custom_call.1} parent=51 // pred_check
          %p387 = pneg %p132
        $region66: #{tpu_custom_call.1} parent=51 // pred_check_branch
          %389 = sbr.rel (%p387) target = $region68
        $region67: #{tpu_custom_call.1} parent=51 // pred_region
          %390 = dma.done [#allocation9], 16
        $region68: #{tpu_custom_call.1} parent=51 // pred_fallthru
          _
        // Predicated region
        $region69: #{tpu_custom_call.1} parent=51 // pred_check
          %p391 = pneg %p153
        $region70: #{tpu_custom_call.1} parent=51 // pred_check_branch
          %393 = sbr.rel (%p391) target = $region72
        $region71: #{tpu_custom_call.1} parent=51 // pred_region
          %394 = dma.done [#allocation9], 256
        $region72: #{tpu_custom_call.1} parent=51 // pred_fallthru
          _
        // Predicated region
        $region73: #{tpu_custom_call.1} parent=51 // pred_check
          %p395 = pneg %p174
        $region74: #{tpu_custom_call.1} parent=51 // pred_check_branch
          %397 = sbr.rel (%p395) target = $region76
        $region75: #{tpu_custom_call.1} parent=51 // pred_region
          %398 = dma.done [#allocation12], 16
        $region76: #{tpu_custom_call.1} parent=51 // pred_fallthru
          _
        // Predicated region
        $region77: #{tpu_custom_call.1} parent=51 // pred_check
          %p399 = pneg %p195
        $region78: #{tpu_custom_call.1} parent=51 // pred_check_branch
          %401 = sbr.rel (%p399) target = $region80
        $region79: #{tpu_custom_call.1} parent=51 // pred_region
          %402 = dma.done [#allocation12], 16
        $region80: #{tpu_custom_call.1} parent=51 // pred_fallthru
          _
        // Predicated region
        $region81: #{tpu_custom_call.1} parent=51 // pred_check
          %p403 = pneg %p216
        $region82: #{tpu_custom_call.1} parent=51 // pred_check_branch
          %405 = sbr.rel (%p403) target = $region84
        $region83: #{tpu_custom_call.1} parent=51 // pred_region
          %406 = dma.done [#allocation15], 16
        $region84: #{tpu_custom_call.1} parent=51 // pred_fallthru
          _
        %s407 = sand.u32 %s51, 1
        %s408 = scalar_lea.sflag [#allocation3], %s407
        %s409 = sand.u32 %s51, 1
        %s410 = smul.addr %s409, 8
        %s411 = scalar_lea.vmem [#allocation2], %s410
        %p412 = pneg %p64
        %p413 = pneg %p61
        %p414 = pneg %p90
        %p415 = pneg %p87
        %p416 = pneg %p111
        %p417 = pneg %p108
        %p418 = pneg %p132
        %p419 = pneg %p129
        %p420 = pneg %p153
        %p421 = pneg %p150
        %p422 = pneg %p174
        %p423 = pneg %p171
        %p424 = pneg %p195
        %p425 = pneg %p192
        %p426 = pneg %p216
        %p427 = pneg %p213
        %p428 = pneg %p244
        %p429 = pneg %p241
        %s430 = sand.u32 %s231, 1
        %s431 = scalar_lea.sflag [#allocation4], %s430
        %s432 = sand.u32 %s231, 1
        %s433 = smul.addr %s432, 8
        %s434 = scalar_lea.vmem [#allocation16], %s433
        %v436 = vld [vmem:[%s374] sm:$0xff]
        %v437 = vld [vmem:[#allocation7] sm:$0x1]
        %v438 = vld [vmem:[#allocation8] sm:$0x1]
        %vm439 = vcmask 261120
        %v440 = vsel %vm439, %v436, 0.0
        %441 = vadd.xlane.f32.xlu0 %v440
        %v442 = vpop.xlane.xlu0 %441
        %v443 = vrcp.pop 32.0
        %v444 = vmul.f32 %v442, %v443
        %v445 = vsub.f32 %v436, %v444
        %v446 = vmul.f32 %v445, %v445
        %v447 = vsel %vm439, %v446, 0.0
        %448 = vadd.xlane.f32.xlu0 %v447
        %v449 = vpop.xlane.xlu0 %448
        %v450 = vmul.f32 %v449, %v443
        %v451 = vadd.f32 %v450, 1e-12
        %v452 = vrsqrt.pop %v451
        %v453 = vmul.f32 %v445, %v452
        %v455 = vlaneseq
        %v456 = vshrl.u32 %v455, 7
        %v457 = vsub.s32 0, %v456
        %v458 = vrot.slane %v437, %v457
        %v460 = vmul.f32 %v458, %v453
        %v462 = vlaneseq
        %v463 = vshrl.u32 %v462, 7
        %v464 = vsub.s32 0, %v463
        %v465 = vrot.slane %v438, %v464
        %v467 = vadd.f32 %v460, %v465
        %v468 = vpack.c.bf16 %v467, %v467
        %v469 = vld [vmem:[#allocation10] sm:$0xf]
        %v470 = vld [vmem:[#allocation10 + $0x4] sm:$0xf]
        %v471 = vld [vmem:[#allocation10 + $0x8] sm:$0xf]
        %v472 = vld [vmem:[#allocation10 + $0xc] sm:$0xf]
        %v473 = vld [vmem:[#allocation11] sm:$0x1]
        %v475 = vlaneseq
        %v476 = vshrl.u32 %v475, 7
        %v477 = vsub.s32 0, %v476
        %v478 = vrot.slane %v473, %v477
        %v484 = vunpack.c.l.b16 %v469
        %v485 = vunpack.c.l.b16 %v470
        %v486 = vunpack.c.l.b16 %v471
        %v487 = vunpack.c.l.b16 %v472
        %v488 = vpack.c.b16 %v485, %v484
        %v489 = vpack.c.b16 %v487, %v486
        %v493 = vsel %vm439, %v468, 0
        %495 = vmatprep.subr.bf16.mxu0 0
        %496 = vmatpush1.bf16.msra.mxu0 %v488
        %497 = vmatprep.subr.bf16.mxu0 0
        %498 = vmatpush1.bf16.msra.mxu0 %v489
        %499 = vmatprep.subr.bf16.mxu0 0
        %500 = vmatpush1.bf16.msra.mxu0 0
        %501 = vmatprep.subr.bf16.mxu0 0
        %502 = vmatpush1.bf16.msra.mxu0 0
        %503 = vmatprep.subr.bf16.mxu0 0
        %504 = vmatpush1.bf16.msra.mxu0 0
        %505 = vmatprep.subr.bf16.mxu0 0
        %506 = vmatpush1.bf16.msra.mxu0 0
        %507 = vmatprep.subr.bf16.mxu0 0
        %508 = vmatpush1.bf16.msra.mxu0 0
        %509 = vmatprep.subr.bf16.mxu0 0
        %510 = vmatpush1.bf16.msra.mxu0 0
        %511 = vmatprep.subr.bf16.mxu0 0
        %512 = vmatpush1.bf16.msra.mxu0 0
        %513 = vmatprep.subr.bf16.mxu0 0
        %514 = vmatpush1.bf16.msra.mxu0 0
        %515 = vmatprep.subr.bf16.mxu0 0
        %516 = vmatpush1.bf16.msra.mxu0 0
        %517 = vmatprep.subr.bf16.mxu0 0
        %518 = vmatpush1.bf16.msra.mxu0 0
        %519 = vmatprep.subr.bf16.mxu0 0
        %520 = vmatpush1.bf16.msra.mxu0 0
        %521 = vmatprep.subr.bf16.mxu0 0
        %522 = vmatpush1.bf16.msra.mxu0 0
        %523 = vmatprep.subr.bf16.mxu0 0
        %524 = vmatpush1.bf16.msra.mxu0 0
        %525 = vmatprep.subr.bf16.mxu0 0
        %526 = vmatpush1.bf16.msra.mxu0 0
        %527 = vmatprep.mubr.bf16.mxu0 0
        %528 = vmatmul.mubr.bf16.gmra.mrb[0].mxu0 %v493
        %v529 = vpop.f32.mrb[0].mxu0
        %v530 = vadd.f32 %v478, %v529
        %v531 = vpop.f32.mrb[0].mxu0
        %v532 = vpop.f32.mrb[0].mxu0
        %v533 = vpop.f32.mrb[0].mxu0
        %534 = vdwg.mxu0
        %v535 = vmax.f32 %v530, 0.0
        %v536 = vld [vmem:[#allocation13] sm:$0x1]
        %v537 = vld [vmem:[#allocation14] sm:$0x1]
        %v538 = vsel %vm439, %v535, 0.0
        %539 = vadd.xlane.f32.xlu0 %v538
        %v540 = vpop.xlane.xlu0 %539
        %v541 = vmul.f32 %v540, %v443
        %v542 = vsub.f32 %v535, %v541
        %v543 = vmul.f32 %v542, %v542
        %v544 = vsel %vm439, %v543, 0.0
        %545 = vadd.xlane.f32.xlu0 %v544
        %v546 = vpop.xlane.xlu0 %545
        %v547 = vmul.f32 %v546, %v443
        %v548 = vadd.f32 %v547, 1e-12
        %v549 = vrsqrt.pop %v548
        %v550 = vmul.f32 %v542, %v549
        %v552 = vlaneseq
        %v553 = vshrl.u32 %v552, 7
        %v554 = vsub.s32 0, %v553
        %v555 = vrot.slane %v536, %v554
        %v557 = vmul.f32 %v555, %v550
        %v559 = vlaneseq
        %v560 = vshrl.u32 %v559, 7
        %v561 = vsub.s32 0, %v560
        %v562 = vrot.slane %v537, %v561
        %v564 = vadd.f32 %v557, %v562
        %v565 = vld [vmem:[#allocation5] sm:$0xff]
        %v566 = vadd.f32 %v564, %v565
        %567 = vst.msk [vmem:[%s434] sm:$0xff] %vm439, %v566
        %s568 = sand.u32 %s231, 1
        %s569 = scalar_lea.sflag [#allocation4], %s568
        %s570 = sand.u32 %s231, 1
        %s571 = smul.addr %s570, 8
        %s572 = scalar_lea.vmem [#allocation16], %s571
        // Predicated region
        $region85: #{tpu_custom_call.1} parent=51 // pred_check
          %p573 = pneg %p241
        $region86: #{tpu_custom_call.1} parent=51 // pred_check_branch
          %575 = sbr.rel (%p573) target = $region88
        $region87: #{tpu_custom_call.1} parent=51 // pred_region
          %s577 = ssub.s32 128, 128
          %578 = vsyncadd %s569, %s577
          %s579 = sadd.s32 %s34, %s33
          %s580 = smul.addr %s579, 128
          %s581 = scalar_lea.hbm %s8, %s580
          %s583 = sshll.u32 %s572, 4
          %s584 = int_to_ptr.vmem [resolvable:$true] %s583
          %586 = dma.vmem_to_hbm [thread:$0]  %s584, 128, %s581, %s569
        $region88: #{tpu_custom_call.1} parent=51 // pred_fallthru
          _
      $region52: #{tpu_custom_call.1} parent=5 // pred_fallthru
        _
      %p587 = scmp.le.s32.totalorder 2, %s24
      // Predicated region
      $region89: #{tpu_custom_call.1} parent=5 // pred_check
        %p588 = pneg %p587
      $region90: #{tpu_custom_call.1} parent=5 // pred_check_branch
        %590 = sbr.rel (%p588) target = $region92
      $region91: #{tpu_custom_call.1} parent=5 // pred_region
        %s591 = ssub.s32 %s24, 2
        // Predicated region
        $region93: #{tpu_custom_call.1} parent=91 // pred_check
          %p592 = pneg %p247
        $region94: #{tpu_custom_call.1} parent=91 // pred_check_branch
          %594 = sbr.rel (%p592) target = $region96
        $region95: #{tpu_custom_call.1} parent=91 // pred_region
          %s595 = sand.u32 %s232, 1
          %s596 = scalar_lea.sflag [#allocation4], %s595
          %s597 = sand.u32 %s232, 1
          %s598 = smul.addr %s597, 8
          %s599 = scalar_lea.vmem [#allocation16], %s598
          %600 = dma.done %s596, 128
        $region96: #{tpu_custom_call.1} parent=91 // pred_fallthru
          _
      $region92: #{tpu_custom_call.1} parent=5 // pred_fallthru
        _
    $region6: #{tpu_custom_call.1} parent=1 // loop_footer
      %s28 = sadd.s32 1, %s24
    $region7: #{tpu_custom_call.1} parent=1 // loop_footer_branch
      %23 = sbr.rel target = $region3
    $region8: #{tpu_custom_call.1} parent=1 // loop_exit
      _
    %601 = vsyncpa [#allocation3], 1
    %s602 = scalar_lea.sflag [#allocation3], 1
    %603 = vsyncpa %s602, 1
    %604 = vsyncpa [#allocation6], 1
    %605 = vsyncpa [#allocation9], 1
    %606 = vsyncpa [#allocation12], 1
    %607 = vsyncpa [#allocation15], 1
    %608 = vsyncpa [#allocation4], 1
    %s609 = scalar_lea.sflag [#allocation4], 1
    %610 = vsyncpa %s609, 1

// kernel: tpu_custom_call.1
$region0: #{tpu_custom_call.1}
  #allocation0 [shape = 'u32[]', space=smem, size = 0x4, offset = 0x4, fixed_abs, tag = 'smem constant byte address 0x4 - core index']
  #allocation1 [shape = 'u32[144,128]{1,0:T(1,128)}', space=vmem, size = 0x12000, scoped, tag = 'internal scratch']
  %s0 = inlined_call_operand.hbm [shape: f32[2,8,32], index: 0, kind: input, shape index: {}]
  %s1 = inlined_call_operand.hbm [shape: f32[8,32], index: 1, kind: input, shape index: {}]
  %s2 = inlined_call_operand.hbm [shape: f32[1,32], index: 2, kind: input, shape index: {}]
  %s3 = inlined_call_operand.hbm [shape: f32[1,32], index: 3, kind: input, shape index: {}]
  %s4 = inlined_call_operand.hbm [shape: bf16[32,32], index: 4, kind: input, shape index: {}]
  %s5 = inlined_call_operand.hbm [shape: f32[1,32], index: 5, kind: input, shape index: {}]
  %s6 = inlined_call_operand.hbm [shape: f32[1,32], index: 6, kind: input, shape index: {}]
  %s7 = inlined_call_operand.hbm [shape: f32[1,32], index: 7, kind: input, shape index: {}]
  %s8 = inlined_call_operand.hbm [shape: f32[2,8,32], index: 8, kind: output, shape index: {}]
  %s9 = sld [smem:[#allocation0]]
  $region97: #{tpu_custom_call.1} parent=0
    _
  %s11 = ssub.s32 1, %s9
  %s12 = scalar_select 0, %s11, %s9
  $region1: #{tpu_custom_call.1} parent=0
    #allocation2 [shape = 'u8[8192]{0}', space=vmem, size = 0x2000, scoped, tag = 'input window, operand 0']
    #allocation3 [shape = 's32[2]{0}', space=sflag, size = 0x8, scoped, tag = 'scoped memory for tpu_custom_call.1']
    #allocation4 [shape = 's32[2]{0}', space=sflag, size = 0x8, scoped, tag = 'scoped memory for tpu_custom_call.1']
    #allocation5 [shape = 'u8[4096]{0}', space=vmem, size = 0x1000, scoped, tag = 'input window, operand 1, single buffered']
    #allocation6 [shape = 's32[1]{0}', space=sflag, size = 0x4, scoped, tag = 'scoped memory for tpu_custom_call.1']
    #allocation7 [shape = 'u8[512]{0}', space=vmem, size = 0x400, scoped, tag = 'input window, operand 2, single buffered']
    #allocation8 [shape = 'u8[512]{0}', space=vmem, size = 0x400, scoped, tag = 'input window, operand 3, single buffered']
    #allocation9 [shape = 's32[1]{0}', space=sflag, size = 0x4, scoped, tag = 'scoped memory for tpu_custom_call.1']
    #allocation10 [shape = 'u8[8192]{0}', space=vmem, size = 0x2000, scoped, tag = 'input window, operand 4, single buffered']
    #allocation11 [shape = 'u8[512]{0}', space=vmem, size = 0x400, scoped, tag = 'input window, operand 5, single buffered']
    #allocation12 [shape = 's32[1]{0}', space=sflag, size = 0x4, scoped, tag = 'scoped memory for tpu_custom_call.1']
    #allocation13 [shape = 'u8[512]{0}', space=vmem, size = 0x400, scoped, tag = 'input window, operand 6, single buffered']
    #allocation14 [shape = 'u8[512]{0}', space=vmem, size = 0x400, scoped, tag = 'input window, operand 7, single buffered']
    #allocation15 [shape = 's32[1]{0}', space=sflag, size = 0x4, scoped, tag = 'scoped memory for tpu_custom_call.1']
    #allocation16 [shape = 'u8[8192]{0}', space=vmem, size = 0x2000, scoped, tag = 'output window, operand 0']
    %13 = vsyncpa [#allocation3], 0
    %s14 = scalar_lea.sflag [#allocation3], 1
    %15 = vsyncpa %s14, 0
    %16 = vsyncpa [#allocation6], 0
    %17 = vsyncpa [#allocation9], 0
    %18 = vsyncpa [#allocation12], 0
    %19 = vsyncpa [#allocation15], 0
    %20 = vsyncpa [#allocation4], 0
    %s21 = scalar_lea.sflag [#allocation4], 1
    %22 = vsyncpa %s21, 0
    loop: start=0, step=1, limit=4
    $region2: #{tpu_custom_call.1} parent=1 // loop_pre_header
      _
    $region3: #{tpu_custom_call.1} parent=1 // loop_header
      %s24 = sphi 0, %s28
      %p25 = scmp.ge.s32.totalorder %s24, 4
      %s31 = sphi 0, %s43
      %s32 = sphi 0, %s39
      %s33 = sphi 0, %s31
      %s34 = sphi 0, %s32
      %s35 = sphi 0, %s33
      %s36 = sphi 0, %s34
      %s48 = sphi 0, %s50
      %s51 = sphi 0, %s48
      %s52 = sphi 0, %s51
      %s68 = sphi 0, %s52
      %s74 = sphi 0, %s76
      %s77 = sphi 0, %s74
      %s78 = sphi 0, %s77
      %s94 = sphi 0, %s78
      %s98 = sphi 0, %s98
      %s100 = sphi 0, %s98
      %s101 = sphi 0, %s100
      %s115 = sphi 0, %s101
      %s119 = sphi 0, %s119
      %s121 = sphi 0, %s119
      %s122 = sphi 0, %s121
      %s136 = sphi 0, %s122
      %s140 = sphi 0, %s140
      %s142 = sphi 0, %s140
      %s143 = sphi 0, %s142
      %s157 = sphi 0, %s143
      %s161 = sphi 0, %s161
      %s163 = sphi 0, %s161
      %s164 = sphi 0, %s163
      %s178 = sphi 0, %s164
      %s182 = sphi 0, %s182
      %s184 = sphi 0, %s182
      %s185 = sphi 0, %s184
      %s199 = sphi 0, %s185
      %s203 = sphi 0, %s203
      %s205 = sphi 0, %s203
      %s206 = sphi 0, %s205
      %s220 = sphi 0, %s206
      %s228 = sphi 0, %s230
      %s231 = sphi 0, %s228
      %s232 = sphi 0, %s231
      %s248 = sphi 0, %s232
    $region4: #{tpu_custom_call.1} parent=1 // loop_header_branch
      %27 = sbr.rel (%p25) target = $region8
    $region5: #{tpu_custom_call.1} parent=1 // loop_body
      %s29 = ssub.s32 %s24, 1
      %s30 = ssub.s32 %s24, 2
      %s37 = sadd.s32 1, %s32
      %p38 = scmp.ge.s32.totalorder %s37, 1
      %s39 = scalar_select %p38, 0, %s37
      %s40 = sadd.s32 1, %s31
      %s41 = scalar_select %p38, %s40, %s31
      %p42 = scmp.ge.s32.totalorder %s41, 2
      %s43 = scalar_select %p42, 0, %s41
      %s44 = ssub.s32 %s31, %s43
      %s45 = ssub.s32 %s32, %s39
      %s46 = sor.u32 %s44, %s45
      %p47 = scmp.eq.s32.totalorder %s46, 0
      %s49 = sadd.s32 %s48, 1
      %s50 = scalar_select %p47, %s48, %s49
      %p53 = pneg %p47
      %p54 = scmp.eq.s32.totalorder %s24, 1
      %p55 = por %p53, %p54
      %p56 = scmp.ne.s32.totalorder %s48, %s51
      %p57 = scmp.eq.s32.totalorder %s24, 0
      %p58 = por %p56, %p57
      %p59 = scmp.ne.s32.totalorder %s48, %s51
      %p60 = scmp.eq.s32.totalorder %s29, 1
      %p61 = por %p59, %p60
      %p62 = scmp.ne.s32.totalorder %s51, %s52
      %p63 = scmp.eq.s32.totalorder %s29, 0
      %p64 = por %p62, %p63
      %p65 = scmp.ne.s32.totalorder %s51, %s52
      %p66 = scmp.eq.s32.totalorder %s30, 1
      %p67 = por %p65, %p66
      %p69 = scmp.ne.s32.totalorder %s52, %s68
      %p70 = scmp.eq.s32.totalorder %s30, 0
      %p71 = por %p69, %p70
      %s72 = ssub.s32 %s32, %s39
      %p73 = scmp.eq.s32.totalorder %s72, 0
      %s75 = sadd.s32 %s74, 1
      %s76 = scalar_select %p73, %s74, %s75
      %p79 = pneg %p73
      %p80 = scmp.eq.s32.totalorder %s24, 1
      %p81 = por %p79, %p80
      %p82 = scmp.ne.s32.totalorder %s74, %s77
      %p83 = scmp.eq.s32.totalorder %s24, 0
      %p84 = por %p82, %p83
      %p85 = scmp.ne.s32.totalorder %s74, %s77
      %p86 = scmp.eq.s32.totalorder %s29, 1
      %p87 = por %p85, %p86
      %p88 = scmp.ne.s32.totalorder %s77, %s78
      %p89 = scmp.eq.s32.totalorder %s29, 0
      %p90 = por %p88, %p89
      %p91 = scmp.ne.s32.totalorder %s77, %s78
      %p92 = scmp.eq.s32.totalorder %s30, 1
      %p93 = por %p91, %p92
      %p95 = scmp.ne.s32.totalorder %s78, %s94
      %p96 = scmp.eq.s32.totalorder %s30, 0
      %p97 = por %p95, %p96
      %s99 = sadd.s32 %s98, 1
      %p102 = scmp.eq.s32.totalorder %s24, 1
      %p103 = scmp.ne.s32.totalorder %s98, %s100
      %p104 = scmp.eq.s32.totalorder %s24, 0
      %p105 = por %p103, %p104
      %p106 = scmp.ne.s32.totalorder %s98, %s100
      %p107 = scmp.eq.s32.totalorder %s29, 1
      %p108 = por %p106, %p107
      %p109 = scmp.ne.s32.totalorder %s100, %s101
      %p110 = scmp.eq.s32.totalorder %s29, 0
      %p111 = por %p109, %p110
      %p112 = scmp.ne.s32.totalorder %s100, %s101
      %p113 = scmp.eq.s32.totalorder %s30, 1
      %p114 = por %p112, %p113
      %p116 = scmp.ne.s32.totalorder %s101, %s115
      %p117 = scmp.eq.s32.totalorder %s30, 0
      %p118 = por %p116, %p117
      %s120 = sadd.s32 %s119, 1
      %p123 = scmp.eq.s32.totalorder %s24, 1
      %p124 = scmp.ne.s32.totalorder %s119, %s121
      %p125 = scmp.eq.s32.totalorder %s24, 0
      %p126 = por %p124, %p125
      %p127 = scmp.ne.s32.totalorder %s119, %s121
      %p128 = scmp.eq.s32.totalorder %s29, 1
      %p129 = por %p127, %p128
      %p130 = scmp.ne.s32.totalorder %s121, %s122
      %p131 = scmp.eq.s32.totalorder %s29, 0
      %p132 = por %p130, %p131
      %p133 = scmp.ne.s32.totalorder %s121, %s122
      %p134 = scmp.eq.s32.totalorder %s30, 1
      %p135 = por %p133, %p134
      %p137 = scmp.ne.s32.totalorder %s122, %s136
      %p138 = scmp.eq.s32.totalorder %s30, 0
      %p139 = por %p137, %p138
      %s141 = sadd.s32 %s140, 1
      %p144 = scmp.eq.s32.totalorder %s24, 1
      %p145 = scmp.ne.s32.totalorder %s140, %s142
      %p146 = scmp.eq.s32.totalorder %s24, 0
      %p147 = por %p145, %p146
      %p148 = scmp.ne.s32.totalorder %s140, %s142
      %p149 = scmp.eq.s32.totalorder %s29, 1
      %p150 = por %p148, %p149
      %p151 = scmp.ne.s32.totalorder %s142, %s143
      %p152 = scmp.eq.s32.totalorder %s29, 0
      %p153 = por %p151, %p152
      %p154 = scmp.ne.s32.totalorder %s142, %s143
      %p155 = scmp.eq.s32.totalorder %s30, 1
      %p156 = por %p154, %p155
      %p158 = scmp.ne.s32.totalorder %s143, %s157
      %p159 = scmp.eq.s32.totalorder %s30, 0
      %p160 = por %p158, %p159
      %s162 = sadd.s32 %s161, 1
      %p165 = scmp.eq.s32.totalorder %s24, 1
      %p166 = scmp.ne.s32.totalorder %s161, %s163
      %p167 = scmp.eq.s32.totalorder %s24, 0
      %p168 = por %p166, %p167
      %p169 = scmp.ne.s32.totalorder %s161, %s163
      %p170 = scmp.eq.s32.totalorder %s29, 1
      %p171 = por %p169, %p170
      %p172 = scmp.ne.s32.totalorder %s163, %s164
      %p173 = scmp.eq.s32.totalorder %s29, 0
      %p174 = por %p172, %p173
      %p175 = scmp.ne.s32.totalorder %s163, %s164
      %p176 = scmp.eq.s32.totalorder %s30, 1
      %p177 = por %p175, %p176
      %p179 = scmp.ne.s32.totalorder %s164, %s178
      %p180 = scmp.eq.s32.totalorder %s30, 0
      %p181 = por %p179, %p180
      %s183 = sadd.s32 %s182, 1
      %p186 = scmp.eq.s32.totalorder %s24, 1
      %p187 = scmp.ne.s32.totalorder %s182, %s184
      %p188 = scmp.eq.s32.totalorder %s24, 0
      %p189 = por %p187, %p188
      %p190 = scmp.ne.s32.totalorder %s182, %s184
      %p191 = scmp.eq.s32.totalorder %s29, 1
      %p192 = por %p190, %p191
      %p193 = scmp.ne.s32.totalorder %s184, %s185
      %p194 = scmp.eq.s32.totalorder %s29, 0
      %p195 = por %p193, %p194
      %p196 = scmp.ne.s32.totalorder %s184, %s185
      %p197 = scmp.eq.s32.totalorder %s30, 1
      %p198 = por %p196, %p197
      %p200 = scmp.ne.s32.totalorder %s185, %s199
      %p201 = scmp.eq.s32.totalorder %s30, 0
      %p202 = por %p200, %p201
      %s204 = sadd.s32 %s203, 1
      %p207 = scmp.eq.s32.totalorder %s24, 1
      %p208 = scmp.ne.s32.totalorder %s203, %s205
      %p209 = scmp.eq.s32.totalorder %s24, 0
      %p210 = por %p208, %p209
      %p211 = scmp.ne.s32.totalorder %s203, %s205
      %p212 = scmp.eq.s32.totalorder %s29, 1
      %p213 = por %p211, %p212
      %p214 = scmp.ne.s32.totalorder %s205, %s206
      %p215 = scmp.eq.s32.totalorder %s29, 0
      %p216 = por %p214, %p215
      %p217 = scmp.ne.s32.totalorder %s205, %s206
      %p218 = scmp.eq.s32.totalorder %s30, 1
      %p219 = por %p217, %p218
      %p221 = scmp.ne.s32.totalorder %s206, %s220
      %p222 = scmp.eq.s32.totalorder %s30, 0
      %p223 = por %p221, %p222
      %s224 = ssub.s32 %s31, %s43
      %s225 = ssub.s32 %s32, %s39
      %s226 = sor.u32 %s224, %s225
      %p227 = scmp.eq.s32.totalorder %s226, 0
      %s229 = sadd.s32 %s228, 1
      %s230 = scalar_select %p227, %s228, %s229
      %p233 = pneg %p227
      %p234 = scmp.eq.s32.totalorder %s24, 1
      %p235 = por %p233, %p234
      %p236 = scmp.ne.s32.totalorder %s228, %s231
      %p237 = scmp.eq.s32.totalorder %s24, 0
      %p238 = por %p236, %p237
      %p239 = scmp.ne.s32.totalorder %s228, %s231
      %p240 = scmp.eq.s32.totalorder %s29, 1
      %p241 = por %p239, %p240
      %p242 = scmp.ne.s32.totalorder %s231, %s232
      %p243 = scmp.eq.s32.totalorder %s29, 0
      %p244 = por %p242, %p243
      %p245 = scmp.ne.s32.totalorder %s231, %s232
      %p246 = scmp.eq.s32.totalorder %s30, 1
      %p247 = por %p245, %p246
      %p249 = scmp.ne.s32.totalorder %s232, %s248
      %p250 = scmp.eq.s32.totalorder %s30, 0
      %p251 = por %p249, %p250
      %p252 = scmp.le.s32.totalorder 1, %s24
      %p253 = scmp.lt.s32.totalorder %s24, 3
      %p254 = pnand %p252, %p253
      %p255 = pneg %p254
      // Predicated region
      $region9: #{tpu_custom_call.1} parent=5 // pred_check
        _
      $region10: #{tpu_custom_call.1} parent=5 // pred_check_branch
        %257 = sbr.rel (%p254) target = $region12
      $region11: #{tpu_custom_call.1} parent=5 // pred_region
        %s258 = ssub.s32 %s24, 1
        // Predicated region
        $region13: #{tpu_custom_call.1} parent=11 // pred_check
          %p259 = pneg %p90
        $region14: #{tpu_custom_call.1} parent=11 // pred_check_branch
          %261 = sbr.rel (%p259) target = $region16
        $region15: #{tpu_custom_call.1} parent=11 // pred_region
          %s263 = ssub.s32 128, 128
          %264 = vsyncadd [#allocation6], %s263
          %s265 = smul.addr %s34, 128
          %s266 = scalar_lea.hbm %s1, %s265
          %s268 = sshll.u32 [#allocation5], 4
          %s269 = int_to_ptr.vmem [resolvable:$true] %s268
          %271 = dma.hbm_to_vmem [thread:$0]  %s266, 128, %s269, [#allocation6]
        $region16: #{tpu_custom_call.1} parent=11 // pred_fallthru
          _
        // Predicated region
        $region17: #{tpu_custom_call.1} parent=11 // pred_check
          %p272 = pneg %p111
        $region18: #{tpu_custom_call.1} parent=11 // pred_check_branch
          %274 = sbr.rel (%p272) target = $region20
        $region19: #{tpu_custom_call.1} parent=11 // pred_region
          %s276 = ssub.s32 16, 16
          %277 = vsyncadd [#allocation6], %s276
          %s279 = sshll.u32 [#allocation7], 4
          %s280 = int_to_ptr.vmem [resolvable:$true] %s279
          %282 = dma.hbm_to_vmem [thread:$0]  %s2, 16, %s280, [#allocation6]
        $region20: #{tpu_custom_call.1} parent=11 // pred_fallthru
          _
        // Predicated region
        $region21: #{tpu_custom_call.1} parent=11 // pred_check
          %p283 = pneg %p132
        $region22: #{tpu_custom_call.1} parent=11 // pred_check_branch
          %285 = sbr.rel (%p283) target = $region24
        $region23: #{tpu_custom_call.1} parent=11 // pred_region
          %s287 = ssub.s32 16, 16
          %288 = vsyncadd [#allocation9], %s287
          %s290 = sshll.u32 [#allocation8], 4
          %s291 = int_to_ptr.vmem [resolvable:$true] %s290
          %293 = dma.hbm_to_vmem [thread:$0]  %s3, 16, %s291, [#allocation9]
        $region24: #{tpu_custom_call.1} parent=11 // pred_fallthru
          _
        // Predicated region
        $region25: #{tpu_custom_call.1} parent=11 // pred_check
          %p294 = pneg %p153
        $region26: #{tpu_custom_call.1} parent=11 // pred_check_branch
          %296 = sbr.rel (%p294) target = $region28
        $region27: #{tpu_custom_call.1} parent=11 // pred_region
          %s298 = ssub.s32 256, 256
          %299 = vsyncadd [#allocation9], %s298
          %s300 = sshll.u32 [#allocation10], 4
          %s301 = int_to_ptr.vmem [resolvable:$true] %s300
          %306 = dma.hbm_to_vmem [thread:$0]  %s4, 256, %s301, [#allocation9], 64, 64, 4
        $region28: #{tpu_custom_call.1} parent=11 // pred_fallthru
          _
        // Predicated region
        $region29: #{tpu_custom_call.1} parent=11 // pred_check
          %p307 = pneg %p174
        $region30: #{tpu_custom_call.1} parent=11 // pred_check_branch
          %309 = sbr.rel (%p307) target = $region32
        $region31: #{tpu_custom_call.1} parent=11 // pred_region
          %s311 = ssub.s32 16, 16
          %312 = vsyncadd [#allocation12], %s311
          %s314 = sshll.u32 [#allocation11], 4
          %s315 = int_to_ptr.vmem [resolvable:$true] %s314
          %317 = dma.hbm_to_vmem [thread:$0]  %s5, 16, %s315, [#allocation12]
        $region32: #{tpu_custom_call.1} parent=11 // pred_fallthru
          _
        // Predicated region
        $region33: #{tpu_custom_call.1} parent=11 // pred_check
          %p318 = pneg %p195
        $region34: #{tpu_custom_call.1} parent=11 // pred_check_branch
          %320 = sbr.rel (%p318) target = $region36
        $region35: #{tpu_custom_call.1} parent=11 // pred_region
          %s322 = ssub.s32 16, 16
          %323 = vsyncadd [#allocation12], %s322
          %s325 = sshll.u32 [#allocation13], 4
          %s326 = int_to_ptr.vmem [resolvable:$true] %s325
          %328 = dma.hbm_to_vmem [thread:$0]  %s6, 16, %s326, [#allocation12]
        $region36: #{tpu_custom_call.1} parent=11 // pred_fallthru
          _
        // Predicated region
        $region37: #{tpu_custom_call.1} parent=11 // pred_check
          %p329 = pneg %p216
        $region38: #{tpu_custom_call.1} parent=11 // pred_check_branch
          %331 = sbr.rel (%p329) target = $region40
        $region39: #{tpu_custom_call.1} parent=11 // pred_region
          %s333 = ssub.s32 16, 16
          %334 = vsyncadd [#allocation15], %s333
          %s336 = sshll.u32 [#allocation14], 4
          %s337 = int_to_ptr.vmem [resolvable:$true] %s336
          %339 = dma.hbm_to_vmem [thread:$0]  %s7, 16, %s337, [#allocation15]
        $region40: #{tpu_custom_call.1} parent=11 // pred_fallthru
          _
      $region12: #{tpu_custom_call.1} parent=5 // pred_fallthru
        _
      %p340 = scmp.lt.s32.totalorder %s24, 2
      // Predicated region
      $region41: #{tpu_custom_call.1} parent=5 // pred_check
        %p341 = pneg %p340
      $region42: #{tpu_custom_call.1} parent=5 // pred_check_branch
        %343 = sbr.rel (%p341) target = $region44
      $region43: #{tpu_custom_call.1} parent=5 // pred_region
        // Predicated region
        $region45: #{tpu_custom_call.1} parent=43 // pred_check
          %p344 = pneg %p58
        $region46: #{tpu_custom_call.1} parent=43 // pred_check_branch
          %346 = sbr.rel (%p344) target = $region48
        $region47: #{tpu_custom_call.1} parent=43 // pred_region
          %s347 = sand.u32 %s48, 1
          %s348 = scalar_lea.sflag [#allocation3], %s347
          %s349 = sand.u32 %s48, 1
          %s350 = smul.addr %s349, 8
          %s351 = scalar_lea.vmem [#allocation2], %s350
          %s353 = ssub.s32 128, 128
          %354 = vsyncadd %s348, %s353
          %s355 = sadd.s32 %s32, %s31
          %s356 = smul.addr %s355, 128
          %s357 = scalar_lea.hbm %s0, %s356
          %s359 = sshll.u32 %s351, 4
          %s360 = int_to_ptr.vmem [resolvable:$true] %s359
          %362 = dma.hbm_to_vmem [thread:$0]  %s357, 128, %s360, %s348
        $region48: #{tpu_custom_call.1} parent=43 // pred_fallthru
          _
      $region44: #{tpu_custom_call.1} parent=5 // pred_fallthru
        _
      %p363 = scmp.le.s32.totalorder 1, %s24
      %p364 = scmp.lt.s32.totalorder %s24, 3
      %p365 = pnand %p363, %p364
      %p366 = pneg %p365
      // Predicated region
      $region49: #{tpu_custom_call.1} parent=5 // pred_check
        _
      $region50: #{tpu_custom_call.1} parent=5 // pred_check_branch
        %368 = sbr.rel (%p365) target = $region52
      $region51: #{tpu_custom_call.1} parent=5 // pred_region
        %s369 = ssub.s32 %s24, 1
        %s370 = sand.u32 %s51, 1
        %s371 = scalar_lea.sflag [#allocation3], %s370
        %s372 = sand.u32 %s51, 1
        %s373 = smul.addr %s372, 8
        %s374 = scalar_lea.vmem [#allocation2], %s373
        // Predicated region
        $region53: #{tpu_custom_call.1} parent=51 // pred_check
          %p375 = pneg %p64
        $region54: #{tpu_custom_call.1} parent=51 // pred_check_branch
          %377 = sbr.rel (%p375) target = $region56
        $region55: #{tpu_custom_call.1} parent=51 // pred_region
          %378 = dma.done %s371, 128
        $region56: #{tpu_custom_call.1} parent=51 // pred_fallthru
          _
        // Predicated region
        $region57: #{tpu_custom_call.1} parent=51 // pred_check
          %p379 = pneg %p90
        $region58: #{tpu_custom_call.1} parent=51 // pred_check_branch
          %381 = sbr.rel (%p379) target = $region60
        $region59: #{tpu_custom_call.1} parent=51 // pred_region
          %382 = dma.done [#allocation6], 128
        $region60: #{tpu_custom_call.1} parent=51 // pred_fallthru
          _
        // Predicated region
        $region61: #{tpu_custom_call.1} parent=51 // pred_check
          %p383 = pneg %p111
        $region62: #{tpu_custom_call.1} parent=51 // pred_check_branch
          %385 = sbr.rel (%p383) target = $region64
        $region63: #{tpu_custom_call.1} parent=51 // pred_region
          %386 = dma.done [#allocation6], 16
        $region64: #{tpu_custom_call.1} parent=51 // pred_fallthru
          _
        // Predicated region
        $region65: #{tpu_custom_call.1} parent=51 // pred_check
          %p387 = pneg %p132
        $region66: #{tpu_custom_call.1} parent=51 // pred_check_branch
          %389 = sbr.rel (%p387) target = $region68
        $region67: #{tpu_custom_call.1} parent=51 // pred_region
          %390 = dma.done [#allocation9], 16
        $region68: #{tpu_custom_call.1} parent=51 // pred_fallthru
          _
        // Predicated region
        $region69: #{tpu_custom_call.1} parent=51 // pred_check
          %p391 = pneg %p153
        $region70: #{tpu_custom_call.1} parent=51 // pred_check_branch
          %393 = sbr.rel (%p391) target = $region72
        $region71: #{tpu_custom_call.1} parent=51 // pred_region
          %394 = dma.done [#allocation9], 256
        $region72: #{tpu_custom_call.1} parent=51 // pred_fallthru
          _
        // Predicated region
        $region73: #{tpu_custom_call.1} parent=51 // pred_check
          %p395 = pneg %p174
        $region74: #{tpu_custom_call.1} parent=51 // pred_check_branch
          %397 = sbr.rel (%p395) target = $region76
        $region75: #{tpu_custom_call.1} parent=51 // pred_region
          %398 = dma.done [#allocation12], 16
        $region76: #{tpu_custom_call.1} parent=51 // pred_fallthru
          _
        // Predicated region
        $region77: #{tpu_custom_call.1} parent=51 // pred_check
          %p399 = pneg %p195
        $region78: #{tpu_custom_call.1} parent=51 // pred_check_branch
          %401 = sbr.rel (%p399) target = $region80
        $region79: #{tpu_custom_call.1} parent=51 // pred_region
          %402 = dma.done [#allocation12], 16
        $region80: #{tpu_custom_call.1} parent=51 // pred_fallthru
          _
        // Predicated region
        $region81: #{tpu_custom_call.1} parent=51 // pred_check
          %p403 = pneg %p216
        $region82: #{tpu_custom_call.1} parent=51 // pred_check_branch
          %405 = sbr.rel (%p403) target = $region84
        $region83: #{tpu_custom_call.1} parent=51 // pred_region
          %406 = dma.done [#allocation15], 16
        $region84: #{tpu_custom_call.1} parent=51 // pred_fallthru
          _
        %s407 = sand.u32 %s51, 1
        %s408 = scalar_lea.sflag [#allocation3], %s407
        %s409 = sand.u32 %s51, 1
        %s410 = smul.addr %s409, 8
        %s411 = scalar_lea.vmem [#allocation2], %s410
        %p412 = pneg %p64
        %p413 = pneg %p61
        %p414 = pneg %p90
        %p415 = pneg %p87
        %p416 = pneg %p111
        %p417 = pneg %p108
        %p418 = pneg %p132
        %p419 = pneg %p129
        %p420 = pneg %p153
        %p421 = pneg %p150
        %p422 = pneg %p174
        %p423 = pneg %p171
        %p424 = pneg %p195
        %p425 = pneg %p192
        %p426 = pneg %p216
        %p427 = pneg %p213
        %p428 = pneg %p244
        %p429 = pneg %p241
        %s430 = sand.u32 %s231, 1
        %s431 = scalar_lea.sflag [#allocation4], %s430
        %s432 = sand.u32 %s231, 1
        %s433 = smul.addr %s432, 8
        %s434 = scalar_lea.vmem [#allocation16], %s433
        %v436 = vld [vmem:[%s374] sm:$0xff]
        %v437 = vld [vmem:[#allocation7] sm:$0x1]
        %v438 = vld [vmem:[#allocation8] sm:$0x1]
        %vm439 = vcmask 261120
        %v440 = vsel %vm439, %v436, 0.0
        %441 = vadd.xlane.f32.xlu0 %v440
        %v442 = vpop.xlane.xlu0 %441
        %v443 = vrcp.pop 32.0
        %v444 = vmul.f32 %v442, %v443
        %v445 = vsub.f32 %v436, %v444
        %v446 = vmul.f32 %v445, %v445
        %v447 = vsel %vm439, %v446, 0.0
        %448 = vadd.xlane.f32.xlu0 %v447
        %v449 = vpop.xlane.xlu0 %448
        %v450 = vmul.f32 %v449, %v443
        %v451 = vadd.f32 %v450, 1e-12
        %v452 = vrsqrt.pop %v451
        %v453 = vmul.f32 %v445, %v452
        %v455 = vlaneseq
        %v456 = vshrl.u32 %v455, 7
        %v457 = vsub.s32 0, %v456
        %v458 = vrot.slane %v437, %v457
        %v460 = vmul.f32 %v458, %v453
        %v462 = vlaneseq
        %v463 = vshrl.u32 %v462, 7
        %v464 = vsub.s32 0, %v463
        %v465 = vrot.slane %v438, %v464
        %v467 = vadd.f32 %v460, %v465
        %v468 = vpack.c.bf16 %v467, %v467
        %v469 = vld [vmem:[#allocation10] sm:$0xf]
        %v470 = vld [vmem:[#allocation10 + $0x4] sm:$0xf]
        %v471 = vld [vmem:[#allocation10 + $0x8] sm:$0xf]
        %v472 = vld [vmem:[#allocation10 + $0xc] sm:$0xf]
        %v473 = vld [vmem:[#allocation11] sm:$0x1]
        %v475 = vlaneseq
        %v476 = vshrl.u32 %v475, 7
        %v477 = vsub.s32 0, %v476
        %v478 = vrot.slane %v473, %v477
        %v484 = vunpack.c.l.b16 %v469
        %v485 = vunpack.c.l.b16 %v470
        %v486 = vunpack.c.l.b16 %v471
        %v487 = vunpack.c.l.b16 %v472
        %v488 = vpack.c.b16 %v485, %v484
        %v489 = vpack.c.b16 %v487, %v486
        %v493 = vsel %vm439, %v468, 0
        %495 = vmatprep.subr.bf16.mxu0 0
        %496 = vmatpush1.bf16.msra.mxu0 %v488
        %497 = vmatprep.subr.bf16.mxu0 0
        %498 = vmatpush1.bf16.msra.mxu0 %v489
        %499 = vmatprep.subr.bf16.mxu0 0
        %500 = vmatpush1.bf16.msra.mxu0 0
        %501 = vmatprep.subr.bf16.mxu0 0
        %502 = vmatpush1.bf16.msra.mxu0 0
        %503 = vmatprep.subr.bf16.mxu0 0
        %504 = vmatpush1.bf16.msra.mxu0 0
        %505 = vmatprep.subr.bf16.mxu0 0
        %506 = vmatpush1.bf16.msra.mxu0 0
        %507 = vmatprep.subr.bf16.mxu0 0
        %508 = vmatpush1.bf16.msra.mxu0 0
        %509 = vmatprep.subr.bf16.mxu0 0
        %510 = vmatpush1.bf16.msra.mxu0 0
        %511 = vmatprep.subr.bf16.mxu0 0
        %512 = vmatpush1.bf16.msra.mxu0 0
        %513 = vmatprep.subr.bf16.mxu0 0
        %514 = vmatpush1.bf16.msra.mxu0 0
        %515 = vmatprep.subr.bf16.mxu0 0
        %516 = vmatpush1.bf16.msra.mxu0 0
        %517 = vmatprep.subr.bf16.mxu0 0
        %518 = vmatpush1.bf16.msra.mxu0 0
        %519 = vmatprep.subr.bf16.mxu0 0
        %520 = vmatpush1.bf16.msra.mxu0 0
        %521 = vmatprep.subr.bf16.mxu0 0
        %522 = vmatpush1.bf16.msra.mxu0 0
        %523 = vmatprep.subr.bf16.mxu0 0
        %524 = vmatpush1.bf16.msra.mxu0 0
        %525 = vmatprep.subr.bf16.mxu0 0
        %526 = vmatpush1.bf16.msra.mxu0 0
        %527 = vmatprep.mubr.bf16.mxu0 0
        %528 = vmatmul.mubr.bf16.gmra.mrb[0].mxu0 %v493
        %v529 = vpop.f32.mrb[0].mxu0
        %v530 = vadd.f32 %v478, %v529
        %v531 = vpop.f32.mrb[0].mxu0
        %v532 = vpop.f32.mrb[0].mxu0
        %v533 = vpop.f32.mrb[0].mxu0
        %534 = vdwg.mxu0
        %v535 = vmax.f32 %v530, 0.0
        %v536 = vld [vmem:[#allocation13] sm:$0x1]
        %v537 = vld [vmem:[#allocation14] sm:$0x1]
        %v538 = vsel %vm439, %v535, 0.0
        %539 = vadd.xlane.f32.xlu0 %v538
        %v540 = vpop.xlane.xlu0 %539
        %v541 = vmul.f32 %v540, %v443
        %v542 = vsub.f32 %v535, %v541
        %v543 = vmul.f32 %v542, %v542
        %v544 = vsel %vm439, %v543, 0.0
        %545 = vadd.xlane.f32.xlu0 %v544
        %v546 = vpop.xlane.xlu0 %545
        %v547 = vmul.f32 %v546, %v443
        %v548 = vadd.f32 %v547, 1e-12
        %v549 = vrsqrt.pop %v548
        %v550 = vmul.f32 %v542, %v549
        %v552 = vlaneseq
        %v553 = vshrl.u32 %v552, 7
        %v554 = vsub.s32 0, %v553
        %v555 = vrot.slane %v536, %v554
        %v557 = vmul.f32 %v555, %v550
        %v559 = vlaneseq
        %v560 = vshrl.u32 %v559, 7
        %v561 = vsub.s32 0, %v560
        %v562 = vrot.slane %v537, %v561
        %v564 = vadd.f32 %v557, %v562
        %v565 = vld [vmem:[#allocation5] sm:$0xff]
        %v566 = vadd.f32 %v564, %v565
        %567 = vst.msk [vmem:[%s434] sm:$0xff] %vm439, %v566
        %s568 = sand.u32 %s231, 1
        %s569 = scalar_lea.sflag [#allocation4], %s568
        %s570 = sand.u32 %s231, 1
        %s571 = smul.addr %s570, 8
        %s572 = scalar_lea.vmem [#allocation16], %s571
        // Predicated region
        $region85: #{tpu_custom_call.1} parent=51 // pred_check
          %p573 = pneg %p241
        $region86: #{tpu_custom_call.1} parent=51 // pred_check_branch
          %575 = sbr.rel (%p573) target = $region88
        $region87: #{tpu_custom_call.1} parent=51 // pred_region
          %s577 = ssub.s32 128, 128
          %578 = vsyncadd %s569, %s577
          %s579 = sadd.s32 %s34, %s33
          %s580 = smul.addr %s579, 128
          %s581 = scalar_lea.hbm %s8, %s580
          %s583 = sshll.u32 %s572, 4
          %s584 = int_to_ptr.vmem [resolvable:$true] %s583
          %586 = dma.vmem_to_hbm [thread:$0]  %s584, 128, %s581, %s569
        $region88: #{tpu_custom_call.1} parent=51 // pred_fallthru
          _
      $region52: #{tpu_custom_call.1} parent=5 // pred_fallthru
        _
      %p587 = scmp.le.s32.totalorder 2, %s24
      // Predicated region
      $region89: #{tpu_custom_call.1} parent=5 // pred_check
        %p588 = pneg %p587
      $region90: #{tpu_custom_call.1} parent=5 // pred_check_branch
        %590 = sbr.rel (%p588) target = $region92
      $region91: #{tpu_custom_call.1} parent=5 // pred_region
        %s591 = ssub.s32 %s24, 2
        // Predicated region
        $region93: #{tpu_custom_call.1} parent=91 // pred_check
          %p592 = pneg %p247
        $region94: #{tpu_custom_call.1} parent=91 // pred_check_branch
          %594 = sbr.rel (%p592) target = $region96
        $region95: #{tpu_custom_call.1} parent=91 // pred_region
          %s595 = sand.u32 %s232, 1
          %s596 = scalar_lea.sflag [#allocation4], %s595
          %s597 = sand.u32 %s232, 1
          %s598 = smul.addr %s597, 8
          %s599 = scalar_lea.vmem [#allocation16], %s598
          %600 = dma.done %s596, 128
        $region96: #{tpu_custom_call.1} parent=91 // pred_fallthru
          _
      $region92: #{tpu_custom_call.1} parent=5 // pred_fallthru
        _
    $region6: #{tpu_custom_call.1} parent=1 // loop_footer
      %s28 = sadd.s32 1, %s24
    $region7: #{tpu_custom_call.1} parent=1 // loop_footer_branch
      %23 = sbr.rel target = $region3
    $region8: #{tpu_custom_call.1} parent=1 // loop_exit
      _
    %601 = vsyncpa [#allocation3], 1
    %s602 = scalar_lea.sflag [#allocation3], 1
    %603 = vsyncpa %s602, 1
    %604 = vsyncpa [#allocation6], 1
    %605 = vsyncpa [#allocation9], 1
    %606 = vsyncpa [#allocation12], 1
    %607 = vsyncpa [#allocation15], 1
    %608 = vsyncpa [#allocation4], 1
    %s609 = scalar_lea.sflag [#allocation4], 1
    %610 = vsyncpa %s609, 1

</llo_original>
